<compile_context>
chip_gen: v7x
topology: tpu7x:2x2x1
jax: 0.10.0
libtpu: 0.0.40
codegen_flags: <defaults>
</compile_context>

<pallas_src>
import functools

import jax
import jax.numpy as jnp
from jax.experimental import pallas as pl
from jax.experimental.pallas import tpu as pltpu

_LANE = 128
_SUBLANE = 8


def _round_up(x, m):
    return (x + m - 1) // m * m


def _neumf_kernel(user_ref, item_ref,
                  wu_ref, bu_ref,
                  wi_ref, bi_ref,
                  w1a_ref, w1b_ref, w1c_ref, b1_ref,
                  w2_ref, b2_ref,
                  w3_ref, b3_ref,
                  out_ref,
                  *, apply_sigmoid: bool, mm_dtype):
    f32 = jnp.float32

    # Embedding "learning" Linear layers, feature-major: (F, tb) = (F, n) @ (n, tb).
    ue = jnp.dot(wu_ref[...], user_ref[...], preferred_element_type=f32) + bu_ref[...]
    ie = jnp.dot(wi_ref[...], item_ref[...], preferred_element_type=f32) + bi_ref[...]

    # GMF-style elementwise interaction (f32 on the VPU; v5e has no bf16 VPU).
    inner = ue * ie

    # cat([inner, ue, ie], feature axis) @ w1  ==  w1a@inner + w1b@ue + w1c@ie
    # (w1 split by feature block in the wrapper -> no in-kernel concatenate).
    h1 = (jnp.dot(w1a_ref[...], inner.astype(mm_dtype), preferred_element_type=f32)
          + jnp.dot(w1b_ref[...], ue.astype(mm_dtype), preferred_element_type=f32)
          + jnp.dot(w1c_ref[...], ie.astype(mm_dtype), preferred_element_type=f32)
          + b1_ref[...])
    h1 = jnp.maximum(h1, 0.0)

    h2 = jnp.dot(w2_ref[...], h1.astype(mm_dtype),
                 preferred_element_type=f32) + b2_ref[...]
    h2 = jnp.maximum(h2, 0.0)

    # Final (F/2 -> 1) head: M=1 matmul directly yields a lane-dense (1, tb) row.
    x = jnp.dot(w3_ref[...], h2.astype(mm_dtype),
                preferred_element_type=f32) + b3_ref[0, 0]

    if apply_sigmoid:
        x = jax.nn.sigmoid(x)

    out_ref[...] = x.astype(out_ref.dtype)


def neumf_forward(user, item, params, methods="regression", *, tb=None, use_bf16=True):
    """Pallas implementation of neumf.forward.

    user: (B, num_user) float32
    item: (B, num_item) float32
    params: dict of (in, out)-layout Linear weights/biases (see init_params).
    Returns (B, 1) float32.
    """
    B, num_user = user.shape
    B2, num_item = item.shape
    assert B2 == B
    F = params["wu"].shape[1]
    F2 = params["w2"].shape[1]
    apply_sigmoid = (methods != "regression")
    mm_dtype = jnp.bfloat16 if use_bf16 else jnp.float32
    mm_isize = jnp.dtype(mm_dtype).itemsize

    # ---- kernel-layout ("feature-major") parameters -------------------------
    # Matmul weights in mm_dtype; biases stay f32 (added post-accumulation).
    wuT = params["wu"].T.astype(mm_dtype)                    # (F,  num_user)
    wiT = params["wi"].T.astype(mm_dtype)                    # (F,  num_item)
    buT = params["bu"].T.astype(jnp.float32)                 # (F,  1)
    biT = params["bi"].T.astype(jnp.float32)                 # (F,  1)
    w1 = params["w1"]                                        # (3F, F) rows: inner|user|item
    w1aT = w1[:F].T.astype(mm_dtype)                         # (F, F)
    w1bT = w1[F:2 * F].T.astype(mm_dtype)                    # (F, F)
    w1cT = w1[2 * F:].T.astype(mm_dtype)                     # (F, F)
    b1T = params["b1"].T.astype(jnp.float32)                 # (F, 1)
    w2T = params["w2"].T.astype(mm_dtype)                    # (F2, F)
    b2T = params["b2"].T.astype(jnp.float32)                 # (F2, 1)
    w3T = params["w3"].T.astype(mm_dtype)                    # (1, F2)
    b3 = params["b3"].astype(jnp.float32).reshape(1, 1)      # SMEM scalar

    weights = (wuT, buT, wiT, biT, w1aT, w1bT, w1cT, b1T, w2T, b2T, w3T)

    # ---- batch tiling (batch lives on the lane axis) ------------------------
    if tb is None:
        b8 = _round_up(B, _SUBLANE)
        if b8 <= _LANE:
            tb = b8                                          # tiny batch: one full tile
        else:
            # lane-dense tiles, and >= 2 tiles so both v7x TensorCores get work
            tb = min(512, _round_up(pl.cdiv(B, 2), _LANE))
    tb = max(_SUBLANE, _round_up(int(tb), _SUBLANE))
    Bp = _round_up(B, tb)
    if Bp > tb:                        # >1 tile: blocks must be lane-dense (tb % 128 == 0)
        tb = _round_up(tb, _LANE)
        Bp = _round_up(B, tb)
    grid = (Bp // tb,)

    userT = jnp.pad(user.T.astype(mm_dtype), ((0, 0), (0, Bp - B)))   # (num_user, Bp)
    itemT = jnp.pad(item.T.astype(mm_dtype), ((0, 0), (0, Bp - B)))   # (num_item, Bp)

    # ---- VMEM budgeting ------------------------------------------------------
    def _vmem_limit(weight_bufs):
        w_bytes = mm_isize * (F * num_user + F * num_item + 3 * F * F + F2 * F + F2)
        bias_bytes = 4 * (3 * F + F2 + 1)
        act_bytes = 2 * mm_isize * tb * (num_user + num_item)   # streamed, double-buffered
        out_bytes = 2 * 4 * tb                                   # (1, tb) out row, 2 buffers
        inter_bytes = 4 * tb * (6 * F + 3 * F2)                  # ue/ie/inner/h1/h2 + casts
        budget = (weight_bufs * w_bytes + bias_bytes + act_bytes + out_bytes
                  + inter_bytes + (4 << 20))                     # + compiler scratch headroom
        try:
            cap = int(pltpu.get_tpu_info().vmem_capacity_bytes)
        except Exception:
            cap = 64 << 20                 # v7x per-TensorCore capacity (most restrictive)
        hard_cap = (cap * 3) // 4          # never request more than ~3/4 of physical VMEM
        return int(min(hard_cap, max(16 << 20, budget)))

    flops = int(2 * Bp * (num_user * F + num_item * F + 3 * F * F + F * F2 + F2))
    bytes_accessed = int(
        mm_isize * (F * (num_user + num_item) + 3 * F * F + F2 * F + F2)
        + 4 * (3 * F + F2 + 1)
        + mm_isize * Bp * (num_user + num_item)
        + 4 * Bp)
    cost = pl.CostEstimate(flops=flops,
                           transcendentals=int(Bp) if apply_sigmoid else 0,
                           bytes_accessed=bytes_accessed)

    kernel = functools.partial(_neumf_kernel,
                               apply_sigmoid=apply_sigmoid, mm_dtype=mm_dtype)

    def run(single_buffer_weights):
        w_mode = pl.Buffered(1) if single_buffer_weights else None

        def resident(a):
            # Whole array, constant index_map -> stays in VMEM across grid steps.
            if w_mode is None:
                return pl.BlockSpec(a.shape, lambda i: (0, 0))
            return pl.BlockSpec(a.shape, lambda i: (0, 0), pipeline_mode=w_mode)

        in_specs = [
            pl.BlockSpec((num_user, tb), lambda i: (0, i)),      # user tile (streamed)
            pl.BlockSpec((num_item, tb), lambda i: (0, i)),      # item tile (streamed)
            *[resident(a) for a in weights],                     # resident weights/biases
            pl.BlockSpec(memory_space=pltpu.MemorySpace.SMEM),   # b3 scalar
        ]
        out_specs = pl.BlockSpec((1, tb), lambda i: (0, i))      # lane-dense output row

        return pl.pallas_call(
            kernel,
            out_shape=jax.ShapeDtypeStruct((1, Bp), jnp.float32),
            grid=grid,
            in_specs=in_specs,
            out_specs=out_specs,
            compiler_params=pltpu.CompilerParams(
                dimension_semantics=("parallel",),
                vmem_limit_bytes=_vmem_limit(1 if single_buffer_weights else 2),
            ),
            cost_estimate=cost,
        )(userT, itemT, *weights, b3)

    try:
        out_row = run(True)
    except Exception:
        # TODO(synk): drop this fallback once pl.Buffered(1) single-buffering of
        # resident weight blocks is guaranteed by the minimum supported jax.
        out_row = run(False)

    return out_row[0, :B].reshape(B, 1)


def init_params(key, num_user, num_item, num_features):
    """Deterministic parameter init (shapes mirror the PyTorch module)."""
    f = num_features
    f2 = int(round(num_features / 2, 0))
    keys = jax.random.split(key, 10)

    def lin(kw, kb, n_in, n_out):
        # stored as (in, out) == transpose of torch's (out, in)
        w = jax.random.normal(kw, (n_in, n_out), jnp.float32) * (1.0 / jnp.sqrt(n_in))
        b = jax.random.normal(kb, (1, n_out), jnp.float32) * 0.01
        return w, b

    wu, bu = lin(keys[0], keys[1], num_user, f)
    wi, bi = lin(keys[2], keys[3], num_item, f)
    w1, b1 = lin(keys[4], keys[5], 3 * f, f)
    w2, b2 = lin(keys[6], keys[7], f, f2)
    w3, b3 = lin(keys[8], keys[9], f2, 1)
    return dict(wu=wu, bu=bu, wi=wi, bi=bi,
                w1=w1, b1=b1, w2=w2, b2=b2, w3=w3, b3=b3)


def neumf_reference(user, item, params, methods="regression"):
    """Pure-JAX f32 reference for verification."""
    ue = user @ params["wu"] + params["bu"]
    ie = item @ params["wi"] + params["bi"]
    allcat = jnp.concatenate([ue * ie, ue, ie], axis=1)
    h1 = jnp.maximum(allcat @ params["w1"] + params["b1"], 0.0)
    h2 = jnp.maximum(h1 @ params["w2"] + params["b2"], 0.0)
    x = h2 @ params["w3"] + params["b3"]
    if methods != "regression":
        x = jax.nn.sigmoid(x)
    return x


if __name__ == "__main__":
    key = jax.random.PRNGKey(0)
    k_user, k_item, k_param = jax.random.split(key, 3)

    B = 8
    num_user = 16
    num_item = 24
    num_features = 32

    user = jax.random.normal(k_user, (B, num_user), jnp.float32)
    item = jax.random.normal(k_item, (B, num_item), jnp.float32)
    params = init_params(k_param, num_user, num_item, num_features)

    ref_reg = neumf_reference(user, item, params, methods="regression")
    ref_cls = neumf_reference(user, item, params, methods="classification")

    # Exact-precision path (f32 matmuls): tight structural check of the kernel.
    out_f32 = jax.block_until_ready(
        neumf_forward(user, item, params, methods="regression", use_bf16=False))
    assert out_f32.shape == (B, 1)
    assert jnp.allclose(out_f32, ref_reg, atol=1e-4, rtol=1e-4)

    # Default bf16-MXU fast path: loose check against the f32 reference.
    out_reg = jax.block_until_ready(
        neumf_forward(user, item, params, methods="regression"))
    out_cls = jax.block_until_ready(
        neumf_forward(user, item, params, methods="classification"))
    assert out_reg.shape == (B, 1)
    assert out_cls.shape == (B, 1)
    assert jnp.allclose(out_reg, ref_reg, atol=1e-1, rtol=1e-1)
    assert jnp.allclose(out_cls, ref_cls, atol=5e-2, rtol=5e-2)

    print("KERNEL_OK")
</pallas_src>

<mosaic_0001>
module attributes {stable_mosaic.version = 11 : i64} {
  func.func @_neumf_kernel(%arg0: i32, %arg1: memref<16x8xf32, #tpu.memory_space<vmem>>, %arg2: memref<24x8xf32, #tpu.memory_space<vmem>>, %arg3: memref<32x16xf32, #tpu.memory_space<vmem>>, %arg4: memref<32x1xf32, #tpu.memory_space<vmem>>, %arg5: memref<32x24xf32, #tpu.memory_space<vmem>>, %arg6: memref<32x1xf32, #tpu.memory_space<vmem>>, %arg7: memref<32x32xf32, #tpu.memory_space<vmem>>, %arg8: memref<32x32xf32, #tpu.memory_space<vmem>>, %arg9: memref<32x32xf32, #tpu.memory_space<vmem>>, %arg10: memref<32x1xf32, #tpu.memory_space<vmem>>, %arg11: memref<16x32xf32, #tpu.memory_space<vmem>>, %arg12: memref<16x1xf32, #tpu.memory_space<vmem>>, %arg13: memref<1x16xf32, #tpu.memory_space<vmem>>, %arg14: memref<1x1xf32, #tpu.memory_space<smem>>, %arg15: memref<1x8xf32, #tpu.memory_space<vmem>>) attributes {dimension_semantics = [#tpu.dimension_semantics<parallel>], iteration_bounds = array<i64: 1>, scalar_prefetch = 0 : i64, scratch_operands = 0 : i64, tpu.core_type = #tpu.core_type<tc>, window_params = [{transform_indices = @transform_0, window_bounds = array<i64: 16, 8>}, {transform_indices = @transform_1, window_bounds = array<i64: 24, 8>}, {pipeline_mode = #tpu.pipeline_mode<synchronous>, transform_indices = @transform_2, window_bounds = array<i64: 32, 16>}, {pipeline_mode = #tpu.pipeline_mode<synchronous>, transform_indices = @transform_3, window_bounds = array<i64: 32, 1>}, {pipeline_mode = #tpu.pipeline_mode<synchronous>, transform_indices = @transform_4, window_bounds = array<i64: 32, 24>}, {pipeline_mode = #tpu.pipeline_mode<synchronous>, transform_indices = @transform_5, window_bounds = array<i64: 32, 1>}, {pipeline_mode = #tpu.pipeline_mode<synchronous>, transform_indices = @transform_6, window_bounds = array<i64: 32, 32>}, {pipeline_mode = #tpu.pipeline_mode<synchronous>, transform_indices = @transform_7, window_bounds = array<i64: 32, 32>}, {pipeline_mode = #tpu.pipeline_mode<synchronous>, transform_indices = @transform_8, window_bounds = array<i64: 32, 32>}, {pipeline_mode = #tpu.pipeline_mode<synchronous>, transform_indices = @transform_9, window_bounds = array<i64: 32, 1>}, {pipeline_mode = #tpu.pipeline_mode<synchronous>, transform_indices = @transform_10, window_bounds = array<i64: 16, 32>}, {pipeline_mode = #tpu.pipeline_mode<synchronous>, transform_indices = @transform_11, window_bounds = array<i64: 16, 1>}, {pipeline_mode = #tpu.pipeline_mode<synchronous>, transform_indices = @transform_12, window_bounds = array<i64: 1, 16>}, {transform_indices = @transform_13, window_bounds = array<i64: 1, 1>}, {transform_indices = @transform_14, window_bounds = array<i64: 1, 8>}]} {
    %c0 = arith.constant 0 : index
    %c0_0 = arith.constant 0 : index
    %0 = vector.load %arg3[%c0, %c0_0] : memref<32x16xf32, #tpu.memory_space<vmem>>, vector<32x16xf32>
    %c0_1 = arith.constant 0 : index
    %c0_2 = arith.constant 0 : index
    %1 = vector.load %arg1[%c0_1, %c0_2] : memref<16x8xf32, #tpu.memory_space<vmem>>, vector<16x8xf32>
    %cst = arith.constant dense<0.000000e+00> : vector<32x8xf32>
    %2 = tpu.matmul %0, %1, %cst {dimension_numbers = #tpu.dot_dimension_numbers<[1], [0], [0], [1], [0, 0, 1, 1], [], []>} : vector<32x16xf32>, vector<16x8xf32>, vector<32x8xf32> -> vector<32x8xf32>
    %c0_3 = arith.constant 0 : index
    %c0_4 = arith.constant 0 : index
    %3 = vector.load %arg4[%c0_3, %c0_4] : memref<32x1xf32, #tpu.memory_space<vmem>>, vector<32x1xf32>
    %4 = vector.broadcast %3 : vector<32x1xf32> to vector<32x8xf32>
    %5 = arith.addf %2, %4 : vector<32x8xf32>
    %c0_5 = arith.constant 0 : index
    %c0_6 = arith.constant 0 : index
    %6 = vector.load %arg5[%c0_5, %c0_6] : memref<32x24xf32, #tpu.memory_space<vmem>>, vector<32x24xf32>
    %c0_7 = arith.constant 0 : index
    %c0_8 = arith.constant 0 : index
    %7 = vector.load %arg2[%c0_7, %c0_8] : memref<24x8xf32, #tpu.memory_space<vmem>>, vector<24x8xf32>
    %cst_9 = arith.constant dense<0.000000e+00> : vector<32x8xf32>
    %8 = tpu.matmul %6, %7, %cst_9 {dimension_numbers = #tpu.dot_dimension_numbers<[1], [0], [0], [1], [0, 0, 1, 1], [], []>} : vector<32x24xf32>, vector<24x8xf32>, vector<32x8xf32> -> vector<32x8xf32>
    %c0_10 = arith.constant 0 : index
    %c0_11 = arith.constant 0 : index
    %9 = vector.load %arg6[%c0_10, %c0_11] : memref<32x1xf32, #tpu.memory_space<vmem>>, vector<32x1xf32>
    %10 = vector.broadcast %9 : vector<32x1xf32> to vector<32x8xf32>
    %11 = arith.addf %8, %10 : vector<32x8xf32>
    %12 = arith.mulf %5, %11 : vector<32x8xf32>
    %c0_12 = arith.constant 0 : index
    %c0_13 = arith.constant 0 : index
    %13 = vector.load %arg7[%c0_12, %c0_13] : memref<32x32xf32, #tpu.memory_space<vmem>>, vector<32x32xf32>
    %cst_14 = arith.constant dense<0.000000e+00> : vector<32x8xf32>
    %14 = tpu.matmul %13, %12, %cst_14 {dimension_numbers = #tpu.dot_dimension_numbers<[1], [0], [0], [1], [0, 0, 1, 1], [], []>} : vector<32x32xf32>, vector<32x8xf32>, vector<32x8xf32> -> vector<32x8xf32>
    %c0_15 = arith.constant 0 : index
    %c0_16 = arith.constant 0 : index
    %15 = vector.load %arg8[%c0_15, %c0_16] : memref<32x32xf32, #tpu.memory_space<vmem>>, vector<32x32xf32>
    %cst_17 = arith.constant dense<0.000000e+00> : vector<32x8xf32>
    %16 = tpu.matmul %15, %5, %cst_17 {dimension_numbers = #tpu.dot_dimension_numbers<[1], [0], [0], [1], [0, 0, 1, 1], [], []>} : vector<32x32xf32>, vector<32x8xf32>, vector<32x8xf32> -> vector<32x8xf32>
    %17 = arith.addf %14, %16 : vector<32x8xf32>
    %c0_18 = arith.constant 0 : index
    %c0_19 = arith.constant 0 : index
    %18 = vector.load %arg9[%c0_18, %c0_19] : memref<32x32xf32, #tpu.memory_space<vmem>>, vector<32x32xf32>
    %cst_20 = arith.constant dense<0.000000e+00> : vector<32x8xf32>
    %19 = tpu.matmul %18, %11, %cst_20 {dimension_numbers = #tpu.dot_dimension_numbers<[1], [0], [0], [1], [0, 0, 1, 1], [], []>} : vector<32x32xf32>, vector<32x8xf32>, vector<32x8xf32> -> vector<32x8xf32>
    %20 = arith.addf %17, %19 : vector<32x8xf32>
    %c0_21 = arith.constant 0 : index
    %c0_22 = arith.constant 0 : index
    %21 = vector.load %arg10[%c0_21, %c0_22] : memref<32x1xf32, #tpu.memory_space<vmem>>, vector<32x1xf32>
    %22 = vector.broadcast %21 : vector<32x1xf32> to vector<32x8xf32>
    %23 = arith.addf %20, %22 : vector<32x8xf32>
    %cst_23 = arith.constant 0.000000e+00 : f32
    %24 = vector.broadcast %cst_23 : f32 to vector<32x8xf32>
    %25 = arith.maximumf %23, %24 : vector<32x8xf32>
    %c0_24 = arith.constant 0 : index
    %c0_25 = arith.constant 0 : index
    %26 = vector.load %arg11[%c0_24, %c0_25] : memref<16x32xf32, #tpu.memory_space<vmem>>, vector<16x32xf32>
    %cst_26 = arith.constant dense<0.000000e+00> : vector<16x8xf32>
    %27 = tpu.matmul %26, %25, %cst_26 {dimension_numbers = #tpu.dot_dimension_numbers<[1], [0], [0], [1], [0, 0, 1, 1], [], []>} : vector<16x32xf32>, vector<32x8xf32>, vector<16x8xf32> -> vector<16x8xf32>
    %c0_27 = arith.constant 0 : index
    %c0_28 = arith.constant 0 : index
    %28 = vector.load %arg12[%c0_27, %c0_28] : memref<16x1xf32, #tpu.memory_space<vmem>>, vector<16x1xf32>
    %29 = vector.broadcast %28 : vector<16x1xf32> to vector<16x8xf32>
    %30 = arith.addf %27, %29 : vector<16x8xf32>
    %cst_29 = arith.constant 0.000000e+00 : f32
    %31 = vector.broadcast %cst_29 : f32 to vector<16x8xf32>
    %32 = arith.maximumf %30, %31 : vector<16x8xf32>
    %c0_30 = arith.constant 0 : index
    %c0_31 = arith.constant 0 : index
    %33 = vector.load %arg13[%c0_30, %c0_31] : memref<1x16xf32, #tpu.memory_space<vmem>>, vector<1x16xf32>
    %cst_32 = arith.constant dense<0.000000e+00> : vector<1x8xf32>
    %34 = tpu.matmul %33, %32, %cst_32 {dimension_numbers = #tpu.dot_dimension_numbers<[1], [0], [0], [1], [0, 0, 1, 1], [], []>} : vector<1x16xf32>, vector<16x8xf32>, vector<1x8xf32> -> vector<1x8xf32>
    %c0_33 = arith.constant 0 : index
    %c0_34 = arith.constant 0 : index
    %35 = memref.load %arg14[%c0_33, %c0_34] : memref<1x1xf32, #tpu.memory_space<smem>>
    %36 = vector.broadcast %35 : f32 to vector<1x8xf32>
    %37 = arith.addf %34, %36 : vector<1x8xf32>
    %c0_35 = arith.constant 0 : index
    %c0_36 = arith.constant 0 : index
    %38 = vector.load %arg15[%c0_35, %c0_36] : memref<1x8xf32, #tpu.memory_space<vmem>>, vector<1x8xf32>
    tpu.vector_store %arg15[%c0_35, %c0_36], %37 {strides = array<i32>} : memref<1x8xf32, #tpu.memory_space<vmem>>, vector<1x8xf32>,
    return
  }
  func.func @transform_0(%arg0: i32) -> (i32, i32) {
    %c0_i32 = arith.constant 0 : i32
    %c0_i32_0 = arith.constant 0 : i32
    return %c0_i32, %arg0 : i32, i32
  }
  func.func @transform_1(%arg0: i32) -> (i32, i32) {
    %c0_i32 = arith.constant 0 : i32
    %c0_i32_0 = arith.constant 0 : i32
    return %c0_i32, %arg0 : i32, i32
  }
  func.func @transform_2(%arg0: i32) -> (i32, i32) {
    %c0_i32 = arith.constant 0 : i32
    %c0_i32_0 = arith.constant 0 : i32
    %c0_i32_1 = arith.constant 0 : i32
    return %c0_i32, %c0_i32_0 : i32, i32
  }
  func.func @transform_3(%arg0: i32) -> (i32, i32) {
    %c0_i32 = arith.constant 0 : i32
    %c0_i32_0 = arith.constant 0 : i32
    %c0_i32_1 = arith.constant 0 : i32
    return %c0_i32, %c0_i32_0 : i32, i32
  }
  func.func @transform_4(%arg0: i32) -> (i32, i32) {
    %c0_i32 = arith.constant 0 : i32
    %c0_i32_0 = arith.constant 0 : i32
    %c0_i32_1 = arith.constant 0 : i32
    return %c0_i32, %c0_i32_0 : i32, i32
  }
  func.func @transform_5(%arg0: i32) -> (i32, i32) {
    %c0_i32 = arith.constant 0 : i32
    %c0_i32_0 = arith.constant 0 : i32
    %c0_i32_1 = arith.constant 0 : i32
    return %c0_i32, %c0_i32_0 : i32, i32
  }
  func.func @transform_6(%arg0: i32) -> (i32, i32) {
    %c0_i32 = arith.constant 0 : i32
    %c0_i32_0 = arith.constant 0 : i32
    %c0_i32_1 = arith.constant 0 : i32
    return %c0_i32, %c0_i32_0 : i32, i32
  }
  func.func @transform_7(%arg0: i32) -> (i32, i32) {
    %c0_i32 = arith.constant 0 : i32
    %c0_i32_0 = arith.constant 0 : i32
    %c0_i32_1 = arith.constant 0 : i32
    return %c0_i32, %c0_i32_0 : i32, i32
  }
  func.func @transform_8(%arg0: i32) -> (i32, i32) {
    %c0_i32 = arith.constant 0 : i32
    %c0_i32_0 = arith.constant 0 : i32
    %c0_i32_1 = arith.constant 0 : i32
    return %c0_i32, %c0_i32_0 : i32, i32
  }
  func.func @transform_9(%arg0: i32) -> (i32, i32) {
    %c0_i32 = arith.constant 0 : i32
    %c0_i32_0 = arith.constant 0 : i32
    %c0_i32_1 = arith.constant 0 : i32
    return %c0_i32, %c0_i32_0 : i32, i32
  }
  func.func @transform_10(%arg0: i32) -> (i32, i32) {
    %c0_i32 = arith.constant 0 : i32
    %c0_i32_0 = arith.constant 0 : i32
    %c0_i32_1 = arith.constant 0 : i32
    return %c0_i32, %c0_i32_0 : i32, i32
  }
  func.func @transform_11(%arg0: i32) -> (i32, i32) {
    %c0_i32 = arith.constant 0 : i32
    %c0_i32_0 = arith.constant 0 : i32
    %c0_i32_1 = arith.constant 0 : i32
    return %c0_i32, %c0_i32_0 : i32, i32
  }
  func.func @transform_12(%arg0: i32) -> (i32, i32) {
    %c0_i32 = arith.constant 0 : i32
    %c0_i32_0 = arith.constant 0 : i32
    %c0_i32_1 = arith.constant 0 : i32
    return %c0_i32, %c0_i32_0 : i32, i32
  }
  func.func @transform_13(%arg0: i32) -> (i32, i32) {
    %c0_i32 = arith.constant 0 : i32
    %c0_i32_0 = arith.constant 0 : i32
    %c0_i32_1 = arith.constant 0 : i32
    return %c0_i32, %c0_i32_0 : i32, i32
  }
  func.func @transform_14(%arg0: i32) -> (i32, i32) {
    %c0_i32 = arith.constant 0 : i32
    %c0_i32_0 = arith.constant 0 : i32
    return %c0_i32, %arg0 : i32, i32
  }
}

module attributes {stable_mosaic.version = 11 : i64} {
  func.func @_neumf_kernel(%arg0: i32, %arg1: memref<16x8xf32, #tpu.memory_space<vmem>>, %arg2: memref<24x8xf32, #tpu.memory_space<vmem>>, %arg3: memref<32x16xf32, #tpu.memory_space<vmem>>, %arg4: memref<32x1xf32, #tpu.memory_space<vmem>>, %arg5: memref<32x24xf32, #tpu.memory_space<vmem>>, %arg6: memref<32x1xf32, #tpu.memory_space<vmem>>, %arg7: memref<32x32xf32, #tpu.memory_space<vmem>>, %arg8: memref<32x32xf32, #tpu.memory_space<vmem>>, %arg9: memref<32x32xf32, #tpu.memory_space<vmem>>, %arg10: memref<32x1xf32, #tpu.memory_space<vmem>>, %arg11: memref<16x32xf32, #tpu.memory_space<vmem>>, %arg12: memref<16x1xf32, #tpu.memory_space<vmem>>, %arg13: memref<1x16xf32, #tpu.memory_space<vmem>>, %arg14: memref<1x1xf32, #tpu.memory_space<smem>>, %arg15: memref<1x8xf32, #tpu.memory_space<vmem>>) attributes {dimension_semantics = [#tpu.dimension_semantics<parallel>], iteration_bounds = array<i64: 1>, scalar_prefetch = 0 : i64, scratch_operands = 0 : i64, tpu.core_type = #tpu.core_type<tc>, window_params = [{transform_indices = @transform_0, window_bounds = array<i64: 16, 8>}, {transform_indices = @transform_1, window_bounds = array<i64: 24, 8>}, {pipeline_mode = #tpu.pipeline_mode<synchronous>, transform_indices = @transform_2, window_bounds = array<i64: 32, 16>}, {pipeline_mode = #tpu.pipeline_mode<synchronous>, transform_indices = @transform_3, window_bounds = array<i64: 32, 1>}, {pipeline_mode = #tpu.pipeline_mode<synchronous>, transform_indices = @transform_4, window_bounds = array<i64: 32, 24>}, {pipeline_mode = #tpu.pipeline_mode<synchronous>, transform_indices = @transform_5, window_bounds = array<i64: 32, 1>}, {pipeline_mode = #tpu.pipeline_mode<synchronous>, transform_indices = @transform_6, window_bounds = array<i64: 32, 32>}, {pipeline_mode = #tpu.pipeline_mode<synchronous>, transform_indices = @transform_7, window_bounds = array<i64: 32, 32>}, {pipeline_mode = #tpu.pipeline_mode<synchronous>, transform_indices = @transform_8, window_bounds = array<i64: 32, 32>}, {pipeline_mode = #tpu.pipeline_mode<synchronous>, transform_indices = @transform_9, window_bounds = array<i64: 32, 1>}, {pipeline_mode = #tpu.pipeline_mode<synchronous>, transform_indices = @transform_10, window_bounds = array<i64: 16, 32>}, {pipeline_mode = #tpu.pipeline_mode<synchronous>, transform_indices = @transform_11, window_bounds = array<i64: 16, 1>}, {pipeline_mode = #tpu.pipeline_mode<synchronous>, transform_indices = @transform_12, window_bounds = array<i64: 1, 16>}, {transform_indices = @transform_13, window_bounds = array<i64: 1, 1>}, {transform_indices = @transform_14, window_bounds = array<i64: 1, 8>}]} {
    %c0 = arith.constant 0 : index
    %c0_0 = arith.constant 0 : index
    %0 = vector.load %arg3[%c0, %c0_0] : memref<32x16xf32, #tpu.memory_space<vmem>>, vector<32x16xf32>
    %c0_1 = arith.constant 0 : index
    %c0_2 = arith.constant 0 : index
    %1 = vector.load %arg1[%c0_1, %c0_2] : memref<16x8xf32, #tpu.memory_space<vmem>>, vector<16x8xf32>
    %cst = arith.constant dense<0.000000e+00> : vector<32x8xf32>
    %2 = tpu.matmul %0, %1, %cst {dimension_numbers = #tpu.dot_dimension_numbers<[1], [0], [0], [1], [0, 0, 1, 1], [], []>} : vector<32x16xf32>, vector<16x8xf32>, vector<32x8xf32> -> vector<32x8xf32>
    %c0_3 = arith.constant 0 : index
    %c0_4 = arith.constant 0 : index
    %3 = vector.load %arg4[%c0_3, %c0_4] : memref<32x1xf32, #tpu.memory_space<vmem>>, vector<32x1xf32>
    %4 = vector.broadcast %3 : vector<32x1xf32> to vector<32x8xf32>
    %5 = arith.addf %2, %4 : vector<32x8xf32>
    %c0_5 = arith.constant 0 : index
    %c0_6 = arith.constant 0 : index
    %6 = vector.load %arg5[%c0_5, %c0_6] : memref<32x24xf32, #tpu.memory_space<vmem>>, vector<32x24xf32>
    %c0_7 = arith.constant 0 : index
    %c0_8 = arith.constant 0 : index
    %7 = vector.load %arg2[%c0_7, %c0_8] : memref<24x8xf32, #tpu.memory_space<vmem>>, vector<24x8xf32>
    %cst_9 = arith.constant dense<0.000000e+00> : vector<32x8xf32>
    %8 = tpu.matmul %6, %7, %cst_9 {dimension_numbers = #tpu.dot_dimension_numbers<[1], [0], [0], [1], [0, 0, 1, 1], [], []>} : vector<32x24xf32>, vector<24x8xf32>, vector<32x8xf32> -> vector<32x8xf32>
    %c0_10 = arith.constant 0 : index
    %c0_11 = arith.constant 0 : index
    %9 = vector.load %arg6[%c0_10, %c0_11] : memref<32x1xf32, #tpu.memory_space<vmem>>, vector<32x1xf32>
    %10 = vector.broadcast %9 : vector<32x1xf32> to vector<32x8xf32>
    %11 = arith.addf %8, %10 : vector<32x8xf32>
    %12 = arith.mulf %5, %11 : vector<32x8xf32>
    %c0_12 = arith.constant 0 : index
    %c0_13 = arith.constant 0 : index
    %13 = vector.load %arg7[%c0_12, %c0_13] : memref<32x32xf32, #tpu.memory_space<vmem>>, vector<32x32xf32>
    %cst_14 = arith.constant dense<0.000000e+00> : vector<32x8xf32>
    %14 = tpu.matmul %13, %12, %cst_14 {dimension_numbers = #tpu.dot_dimension_numbers<[1], [0], [0], [1], [0, 0, 1, 1], [], []>} : vector<32x32xf32>, vector<32x8xf32>, vector<32x8xf32> -> vector<32x8xf32>
    %c0_15 = arith.constant 0 : index
    %c0_16 = arith.constant 0 : index
    %15 = vector.load %arg8[%c0_15, %c0_16] : memref<32x32xf32, #tpu.memory_space<vmem>>, vector<32x32xf32>
    %cst_17 = arith.constant dense<0.000000e+00> : vector<32x8xf32>
    %16 = tpu.matmul %15, %5, %cst_17 {dimension_numbers = #tpu.dot_dimension_numbers<[1], [0], [0], [1], [0, 0, 1, 1], [], []>} : vector<32x32xf32>, vector<32x8xf32>, vector<32x8xf32> -> vector<32x8xf32>
    %17 = arith.addf %14, %16 : vector<32x8xf32>
    %c0_18 = arith.constant 0 : index
    %c0_19 = arith.constant 0 : index
    %18 = vector.load %arg9[%c0_18, %c0_19] : memref<32x32xf32, #tpu.memory_space<vmem>>, vector<32x32xf32>
    %cst_20 = arith.constant dense<0.000000e+00> : vector<32x8xf32>
    %19 = tpu.matmul %18, %11, %cst_20 {dimension_numbers = #tpu.dot_dimension_numbers<[1], [0], [0], [1], [0, 0, 1, 1], [], []>} : vector<32x32xf32>, vector<32x8xf32>, vector<32x8xf32> -> vector<32x8xf32>
    %20 = arith.addf %17, %19 : vector<32x8xf32>
    %c0_21 = arith.constant 0 : index
    %c0_22 = arith.constant 0 : index
    %21 = vector.load %arg10[%c0_21, %c0_22] : memref<32x1xf32, #tpu.memory_space<vmem>>, vector<32x1xf32>
    %22 = vector.broadcast %21 : vector<32x1xf32> to vector<32x8xf32>
    %23 = arith.addf %20, %22 : vector<32x8xf32>
    %cst_23 = arith.constant 0.000000e+00 : f32
    %24 = vector.broadcast %cst_23 : f32 to vector<32x8xf32>
    %25 = arith.maximumf %23, %24 : vector<32x8xf32>
    %c0_24 = arith.constant 0 : index
    %c0_25 = arith.constant 0 : index
    %26 = vector.load %arg11[%c0_24, %c0_25] : memref<16x32xf32, #tpu.memory_space<vmem>>, vector<16x32xf32>
    %cst_26 = arith.constant dense<0.000000e+00> : vector<16x8xf32>
    %27 = tpu.matmul %26, %25, %cst_26 {dimension_numbers = #tpu.dot_dimension_numbers<[1], [0], [0], [1], [0, 0, 1, 1], [], []>} : vector<16x32xf32>, vector<32x8xf32>, vector<16x8xf32> -> vector<16x8xf32>
    %c0_27 = arith.constant 0 : index
    %c0_28 = arith.constant 0 : index
    %28 = vector.load %arg12[%c0_27, %c0_28] : memref<16x1xf32, #tpu.memory_space<vmem>>, vector<16x1xf32>
    %29 = vector.broadcast %28 : vector<16x1xf32> to vector<16x8xf32>
    %30 = arith.addf %27, %29 : vector<16x8xf32>
    %cst_29 = arith.constant 0.000000e+00 : f32
    %31 = vector.broadcast %cst_29 : f32 to vector<16x8xf32>
    %32 = arith.maximumf %30, %31 : vector<16x8xf32>
    %c0_30 = arith.constant 0 : index
    %c0_31 = arith.constant 0 : index
    %33 = vector.load %arg13[%c0_30, %c0_31] : memref<1x16xf32, #tpu.memory_space<vmem>>, vector<1x16xf32>
    %cst_32 = arith.constant dense<0.000000e+00> : vector<1x8xf32>
    %34 = tpu.matmul %33, %32, %cst_32 {dimension_numbers = #tpu.dot_dimension_numbers<[1], [0], [0], [1], [0, 0, 1, 1], [], []>} : vector<1x16xf32>, vector<16x8xf32>, vector<1x8xf32> -> vector<1x8xf32>
    %c0_33 = arith.constant 0 : index
    %c0_34 = arith.constant 0 : index
    %35 = memref.load %arg14[%c0_33, %c0_34] : memref<1x1xf32, #tpu.memory_space<smem>>
    %36 = vector.broadcast %35 : f32 to vector<1x8xf32>
    %37 = arith.addf %34, %36 : vector<1x8xf32>
    %c0_35 = arith.constant 0 : index
    %c0_36 = arith.constant 0 : index
    %38 = vector.load %arg15[%c0_35, %c0_36] : memref<1x8xf32, #tpu.memory_space<vmem>>, vector<1x8xf32>
    tpu.vector_store %arg15[%c0_35, %c0_36], %37 {strides = array<i32>} : memref<1x8xf32, #tpu.memory_space<vmem>>, vector<1x8xf32>,
    return
  }
  func.func @transform_0(%arg0: i32) -> (i32, i32) {
    %c0_i32 = arith.constant 0 : i32
    %c0_i32_0 = arith.constant 0 : i32
    return %c0_i32, %arg0 : i32, i32
  }
  func.func @transform_1(%arg0: i32) -> (i32, i32) {
    %c0_i32 = arith.constant 0 : i32
    %c0_i32_0 = arith.constant 0 : i32
    return %c0_i32, %arg0 : i32, i32
  }
  func.func @transform_2(%arg0: i32) -> (i32, i32) {
    %c0_i32 = arith.constant 0 : i32
    %c0_i32_0 = arith.constant 0 : i32
    %c0_i32_1 = arith.constant 0 : i32
    return %c0_i32, %c0_i32_0 : i32, i32
  }
  func.func @transform_3(%arg0: i32) -> (i32, i32) {
    %c0_i32 = arith.constant 0 : i32
    %c0_i32_0 = arith.constant 0 : i32
    %c0_i32_1 = arith.constant 0 : i32
    return %c0_i32, %c0_i32_0 : i32, i32
  }
  func.func @transform_4(%arg0: i32) -> (i32, i32) {
    %c0_i32 = arith.constant 0 : i32
    %c0_i32_0 = arith.constant 0 : i32
    %c0_i32_1 = arith.constant 0 : i32
    return %c0_i32, %c0_i32_0 : i32, i32
  }
  func.func @transform_5(%arg0: i32) -> (i32, i32) {
    %c0_i32 = arith.constant 0 : i32
    %c0_i32_0 = arith.constant 0 : i32
    %c0_i32_1 = arith.constant 0 : i32
    return %c0_i32, %c0_i32_0 : i32, i32
  }
  func.func @transform_6(%arg0: i32) -> (i32, i32) {
    %c0_i32 = arith.constant 0 : i32
    %c0_i32_0 = arith.constant 0 : i32
    %c0_i32_1 = arith.constant 0 : i32
    return %c0_i32, %c0_i32_0 : i32, i32
  }
  func.func @transform_7(%arg0: i32) -> (i32, i32) {
    %c0_i32 = arith.constant 0 : i32
    %c0_i32_0 = arith.constant 0 : i32
    %c0_i32_1 = arith.constant 0 : i32
    return %c0_i32, %c0_i32_0 : i32, i32
  }
  func.func @transform_8(%arg0: i32) -> (i32, i32) {
    %c0_i32 = arith.constant 0 : i32
    %c0_i32_0 = arith.constant 0 : i32
    %c0_i32_1 = arith.constant 0 : i32
    return %c0_i32, %c0_i32_0 : i32, i32
  }
  func.func @transform_9(%arg0: i32) -> (i32, i32) {
    %c0_i32 = arith.constant 0 : i32
    %c0_i32_0 = arith.constant 0 : i32
    %c0_i32_1 = arith.constant 0 : i32
    return %c0_i32, %c0_i32_0 : i32, i32
  }
  func.func @transform_10(%arg0: i32) -> (i32, i32) {
    %c0_i32 = arith.constant 0 : i32
    %c0_i32_0 = arith.constant 0 : i32
    %c0_i32_1 = arith.constant 0 : i32
    return %c0_i32, %c0_i32_0 : i32, i32
  }
  func.func @transform_11(%arg0: i32) -> (i32, i32) {
    %c0_i32 = arith.constant 0 : i32
    %c0_i32_0 = arith.constant 0 : i32
    %c0_i32_1 = arith.constant 0 : i32
    return %c0_i32, %c0_i32_0 : i32, i32
  }
  func.func @transform_12(%arg0: i32) -> (i32, i32) {
    %c0_i32 = arith.constant 0 : i32
    %c0_i32_0 = arith.constant 0 : i32
    %c0_i32_1 = arith.constant 0 : i32
    return %c0_i32, %c0_i32_0 : i32, i32
  }
  func.func @transform_13(%arg0: i32) -> (i32, i32) {
    %c0_i32 = arith.constant 0 : i32
    %c0_i32_0 = arith.constant 0 : i32
    %c0_i32_1 = arith.constant 0 : i32
    return %c0_i32, %c0_i32_0 : i32, i32
  }
  func.func @transform_14(%arg0: i32) -> (i32, i32) {
    %c0_i32 = arith.constant 0 : i32
    %c0_i32_0 = arith.constant 0 : i32
    return %c0_i32, %arg0 : i32, i32
  }
}

</mosaic_0001>

<llo_original>
// kernel: tpu_custom_call.1
$region0: #{tpu_custom_call.1}
  #allocation0 [shape = 'u32[]', space=smem, size = 0x4, offset = 0x4, fixed_abs, tag = 'smem constant byte address 0x4 - core index']
  #allocation1 [shape = 'u32[144,128]{1,0:T(1,128)}', space=vmem, size = 0x12000, scoped, tag = 'internal scratch']
  #allocation2 [shape = 'f32[1,1]{1,0:T(1,128)S(6)}', space=smem, size = 0x200, scoped, tag = 'scoped memory for tpu_custom_call.1']
  %s0 = inlined_call_operand.vmem [shape: f32[16,8], index: 0, kind: input, shape index: {}]
  %s1 = inlined_call_operand.vmem [shape: f32[24,8], index: 1, kind: input, shape index: {}]
  %s2 = inlined_call_operand.vmem [shape: f32[32,16], index: 2, kind: input, shape index: {}]
  %s3 = inlined_call_operand.vmem [shape: f32[32,1], index: 3, kind: input, shape index: {}]
  %s4 = inlined_call_operand.vmem [shape: f32[32,24], index: 4, kind: input, shape index: {}]
  %s5 = inlined_call_operand.vmem [shape: f32[32,1], index: 5, kind: input, shape index: {}]
  %s6 = inlined_call_operand.vmem [shape: f32[32,32], index: 6, kind: input, shape index: {}]
  %s7 = inlined_call_operand.vmem [shape: f32[32,32], index: 7, kind: input, shape index: {}]
  %s8 = inlined_call_operand.vmem [shape: f32[32,32], index: 8, kind: input, shape index: {}]
  %s9 = inlined_call_operand.vmem [shape: f32[32,1], index: 9, kind: input, shape index: {}]
  %s10 = inlined_call_operand.vmem [shape: f32[16,32], index: 10, kind: input, shape index: {}]
  %s11 = inlined_call_operand.vmem [shape: f32[16,1], index: 11, kind: input, shape index: {}]
  %s12 = inlined_call_operand.vmem [shape: f32[1,16], index: 12, kind: input, shape index: {}]
  %s13 = inlined_call_operand.<no memory space> [shape: f32[1,1], index: 13, kind: input, shape index: {}]
  %s14 = inlined_call_operand.hbm [shape: f32[1,8], index: 14, kind: output, shape index: {}]
  %s15 = sld [smem:[#allocation0]]
  $region66: #{tpu_custom_call.1} parent=0
    _
  %s17 = ssub.s32 1, %s15
  %s18 = scalar_select 0, %s17, %s15
  %19 = sst [smem:[#allocation2]] %s13
  $region1: #{tpu_custom_call.1} parent=0
    #allocation3 [shape = 'u8[512]{0}', space=vmem, size = 0x400, scoped, tag = 'output window, operand 0, single buffered']
    #allocation4 [shape = 's32[1]{0}', space=sflag, size = 0x4, scoped, tag = 'scoped memory for tpu_custom_call.1']
    %20 = vsyncpa [#allocation4], 0
    // Predicated region
    $region2: #{tpu_custom_call.1} parent=1 // pred_check
      _
    $region3: #{tpu_custom_call.1} parent=1 // pred_check_branch
      %22 = sbr.rel (0) target = $region5
    $region4: #{tpu_custom_call.1} parent=1 // pred_region
      _
    $region5: #{tpu_custom_call.1} parent=1 // pred_fallthru
      _
    // Predicated region
    $region6: #{tpu_custom_call.1} parent=1 // pred_check
      _
    $region7: #{tpu_custom_call.1} parent=1 // pred_check_branch
      %24 = sbr.rel (0) target = $region9
    $region8: #{tpu_custom_call.1} parent=1 // pred_region
      _
    $region9: #{tpu_custom_call.1} parent=1 // pred_fallthru
      _
    // Predicated region
    $region10: #{tpu_custom_call.1} parent=1 // pred_check
      _
    $region11: #{tpu_custom_call.1} parent=1 // pred_check_branch
      %26 = sbr.rel (0) target = $region13
    $region12: #{tpu_custom_call.1} parent=1 // pred_region
      _
    $region13: #{tpu_custom_call.1} parent=1 // pred_fallthru
      _
    // Predicated region
    $region14: #{tpu_custom_call.1} parent=1 // pred_check
      _
    $region15: #{tpu_custom_call.1} parent=1 // pred_check_branch
      %28 = sbr.rel (0) target = $region17
    $region16: #{tpu_custom_call.1} parent=1 // pred_region
      _
    $region17: #{tpu_custom_call.1} parent=1 // pred_fallthru
      _
    // Predicated region
    $region18: #{tpu_custom_call.1} parent=1 // pred_check
      _
    $region19: #{tpu_custom_call.1} parent=1 // pred_check_branch
      %30 = sbr.rel (0) target = $region21
    $region20: #{tpu_custom_call.1} parent=1 // pred_region
      _
    $region21: #{tpu_custom_call.1} parent=1 // pred_fallthru
      _
    // Predicated region
    $region22: #{tpu_custom_call.1} parent=1 // pred_check
      _
    $region23: #{tpu_custom_call.1} parent=1 // pred_check_branch
      %32 = sbr.rel (0) target = $region25
    $region24: #{tpu_custom_call.1} parent=1 // pred_region
      _
    $region25: #{tpu_custom_call.1} parent=1 // pred_fallthru
      _
    // Predicated region
    $region26: #{tpu_custom_call.1} parent=1 // pred_check
      _
    $region27: #{tpu_custom_call.1} parent=1 // pred_check_branch
      %34 = sbr.rel (0) target = $region29
    $region28: #{tpu_custom_call.1} parent=1 // pred_region
      _
    $region29: #{tpu_custom_call.1} parent=1 // pred_fallthru
      _
    // Predicated region
    $region30: #{tpu_custom_call.1} parent=1 // pred_check
      _
    $region31: #{tpu_custom_call.1} parent=1 // pred_check_branch
      %36 = sbr.rel (0) target = $region33
    $region32: #{tpu_custom_call.1} parent=1 // pred_region
      _
    $region33: #{tpu_custom_call.1} parent=1 // pred_fallthru
      _
    // Predicated region
    $region34: #{tpu_custom_call.1} parent=1 // pred_check
      _
    $region35: #{tpu_custom_call.1} parent=1 // pred_check_branch
      %38 = sbr.rel (0) target = $region37
    $region36: #{tpu_custom_call.1} parent=1 // pred_region
      _
    $region37: #{tpu_custom_call.1} parent=1 // pred_fallthru
      _
    // Predicated region
    $region38: #{tpu_custom_call.1} parent=1 // pred_check
      _
    $region39: #{tpu_custom_call.1} parent=1 // pred_check_branch
      %40 = sbr.rel (0) target = $region41
    $region40: #{tpu_custom_call.1} parent=1 // pred_region
      _
    $region41: #{tpu_custom_call.1} parent=1 // pred_fallthru
      _
    // Predicated region
    $region42: #{tpu_custom_call.1} parent=1 // pred_check
      _
    $region43: #{tpu_custom_call.1} parent=1 // pred_check_branch
      %42 = sbr.rel (0) target = $region45
    $region44: #{tpu_custom_call.1} parent=1 // pred_region
      _
    $region45: #{tpu_custom_call.1} parent=1 // pred_fallthru
      _
    // Predicated region
    $region46: #{tpu_custom_call.1} parent=1 // pred_check
      _
    $region47: #{tpu_custom_call.1} parent=1 // pred_check_branch
      %44 = sbr.rel (0) target = $region49
    $region48: #{tpu_custom_call.1} parent=1 // pred_region
      _
    $region49: #{tpu_custom_call.1} parent=1 // pred_fallthru
      _
    // Predicated region
    $region50: #{tpu_custom_call.1} parent=1 // pred_check
      _
    $region51: #{tpu_custom_call.1} parent=1 // pred_check_branch
      %46 = sbr.rel (0) target = $region53
    $region52: #{tpu_custom_call.1} parent=1 // pred_region
      _
    $region53: #{tpu_custom_call.1} parent=1 // pred_fallthru
      _
    // Predicated region
    $region54: #{tpu_custom_call.1} parent=1 // pred_check
      _
    $region55: #{tpu_custom_call.1} parent=1 // pred_check_branch
      %48 = sbr.rel (0) target = $region57
    $region56: #{tpu_custom_call.1} parent=1 // pred_region
      _
    $region57: #{tpu_custom_call.1} parent=1 // pred_fallthru
      _
    %v49 = vld [vmem:[%s2] sm:$0xff]
    %v50 = vld [vmem:[%s2 + $0x8] sm:$0xff]
    %v51 = vld [vmem:[%s2 + $0x10] sm:$0xff]
    %v52 = vld [vmem:[%s2 + $0x18] sm:$0xff]
    %v53 = vld [vmem:[%s0] sm:$0xff]
    %v54 = vld [vmem:[%s0 + $0x8] sm:$0xff]
    %v55 = vld [vmem:[%s3] sm:$0xff]
    %v56 = vld [vmem:[%s3 + $0x8] sm:$0xff]
    %v57 = vld [vmem:[%s3 + $0x10] sm:$0xff]
    %v58 = vld [vmem:[%s3 + $0x18] sm:$0xff]
    %60 = vset.pattern.permute.xlu0 0
    %61 = vperm.xlu0 %60, %v55
    %v62 = vpop.permute.xlu0 %61
    %65 = vset.pattern.permute.xlu0 0
    %66 = vperm.xlu0 %65, %v56
    %v67 = vpop.permute.xlu0 %66
    %70 = vset.pattern.permute.xlu0 0
    %71 = vperm.xlu0 %70, %v57
    %v72 = vpop.permute.xlu0 %71
    %75 = vset.pattern.permute.xlu0 0
    %76 = vperm.xlu0 %75, %v58
    %v77 = vpop.permute.xlu0 %76
    %vm79 = vcmask 130048
    %v81 = vsel %vm79, %v49, 0
    %v84 = vsel %vm79, %v50, 0
    %v87 = vsel %vm79, %v51, 0
    %v90 = vsel %vm79, %v52, 0
    %92 = vmatprep.subr.mxu0 0.0
    %93 = vmatpush1.msra.mxu0 %v53
    %94 = vmatprep.subr.mxu0 0.0
    %95 = vmatpush1.msra.mxu0 %v54
    %96 = vmatprep.subr.mxu0 0.0
    %97 = vmatpush1.msra.mxu0 0.0
    %98 = vmatprep.subr.mxu0 0.0
    %99 = vmatpush1.msra.mxu0 0.0
    %100 = vmatprep.subr.mxu0 0.0
    %101 = vmatpush1.msra.mxu0 0.0
    %102 = vmatprep.subr.mxu0 0.0
    %103 = vmatpush1.msra.mxu0 0.0
    %104 = vmatprep.subr.mxu0 0.0
    %105 = vmatpush1.msra.mxu0 0.0
    %106 = vmatprep.subr.mxu0 0.0
    %107 = vmatpush1.msra.mxu0 0.0
    %108 = vmatprep.subr.mxu0 0.0
    %109 = vmatpush1.msra.mxu0 0.0
    %110 = vmatprep.subr.mxu0 0.0
    %111 = vmatpush1.msra.mxu0 0.0
    %112 = vmatprep.subr.mxu0 0.0
    %113 = vmatpush1.msra.mxu0 0.0
    %114 = vmatprep.subr.mxu0 0.0
    %115 = vmatpush1.msra.mxu0 0.0
    %116 = vmatprep.subr.mxu0 0.0
    %117 = vmatpush1.msra.mxu0 0.0
    %118 = vmatprep.subr.mxu0 0.0
    %119 = vmatpush1.msra.mxu0 0.0
    %120 = vmatprep.subr.mxu0 0.0
    %121 = vmatpush1.msra.mxu0 0.0
    %122 = vmatprep.subr.mxu0 0.0
    %123 = vmatpush1.msra.mxu0 0.0
    %124 = vmatprep.subr.mxu0 0.0
    %125 = vmatpush1.msra.mxu0 0.0
    %126 = vmatprep.subr.mxu0 0.0
    %127 = vmatpush1.msra.mxu0 0.0
    %128 = vmatprep.subr.mxu0 0.0
    %129 = vmatpush1.msra.mxu0 0.0
    %130 = vmatprep.subr.mxu0 0.0
    %131 = vmatpush1.msra.mxu0 0.0
    %132 = vmatprep.subr.mxu0 0.0
    %133 = vmatpush1.msra.mxu0 0.0
    %134 = vmatprep.subr.mxu0 0.0
    %135 = vmatpush1.msra.mxu0 0.0
    %136 = vmatprep.subr.mxu0 0.0
    %137 = vmatpush1.msra.mxu0 0.0
    %138 = vmatprep.subr.mxu0 0.0
    %139 = vmatpush1.msra.mxu0 0.0
    %140 = vmatprep.subr.mxu0 0.0
    %141 = vmatpush1.msra.mxu0 0.0
    %142 = vmatprep.subr.mxu0 0.0
    %143 = vmatpush1.msra.mxu0 0.0
    %144 = vmatprep.subr.mxu0 0.0
    %145 = vmatpush1.msra.mxu0 0.0
    %146 = vmatprep.subr.mxu0 0.0
    %147 = vmatpush1.msra.mxu0 0.0
    %148 = vmatprep.subr.mxu0 0.0
    %149 = vmatpush1.msra.mxu0 0.0
    %150 = vmatprep.subr.mxu0 0.0
    %151 = vmatpush1.msra.mxu0 0.0
    %152 = vmatprep.subr.mxu0 0.0
    %153 = vmatpush1.msra.mxu0 0.0
    %154 = vmatprep.subr.mxu0 0.0
    %155 = vmatpush1.msra.mxu0 0.0
    %156 = vmatprep.mubr.f32.mxu0 0.0
    %157 = vmatmul.mubr.f32.gmra.mrb[0].mxu0 %v81
    %v158 = vpop.f32.mrb[0].mxu0
    %v159 = vadd.f32 %v62, %v158
    %v160 = vpop.f32.mrb[0].mxu0
    %161 = vmatprep.mubr.f32.mxu0 0.0
    %162 = vmatmul.mubr.f32.gmra.mrb[0].mxu0 %v84
    %v163 = vpop.f32.mrb[0].mxu0
    %v164 = vadd.f32 %v67, %v163
    %v165 = vpop.f32.mrb[0].mxu0
    %166 = vmatprep.mubr.f32.mxu0 0.0
    %167 = vmatmul.mubr.f32.gmra.mrb[0].mxu0 %v87
    %v168 = vpop.f32.mrb[0].mxu0
    %v169 = vadd.f32 %v72, %v168
    %v170 = vpop.f32.mrb[0].mxu0
    %171 = vmatprep.mubr.f32.mxu0 0.0
    %172 = vmatmul.mubr.f32.gmra.mrb[0].mxu0 %v90
    %v173 = vpop.f32.mrb[0].mxu0
    %v174 = vadd.f32 %v77, %v173
    %v175 = vpop.f32.mrb[0].mxu0
    %176 = vdwg.mxu0
    %v177 = vld [vmem:[%s4] sm:$0xff]
    %v178 = vld [vmem:[%s4 + $0x8] sm:$0xff]
    %v179 = vld [vmem:[%s4 + $0x10] sm:$0xff]
    %v180 = vld [vmem:[%s4 + $0x18] sm:$0xff]
    %v181 = vld [vmem:[%s1] sm:$0xff]
    %v182 = vld [vmem:[%s1 + $0x8] sm:$0xff]
    %v183 = vld [vmem:[%s1 + $0x10] sm:$0xff]
    %v184 = vld [vmem:[%s5] sm:$0xff]
    %v185 = vld [vmem:[%s5 + $0x8] sm:$0xff]
    %v186 = vld [vmem:[%s5 + $0x10] sm:$0xff]
    %v187 = vld [vmem:[%s5 + $0x18] sm:$0xff]
    %189 = vset.pattern.permute.xlu0 0
    %190 = vperm.xlu0 %189, %v184
    %v191 = vpop.permute.xlu0 %190
    %194 = vset.pattern.permute.xlu0 0
    %195 = vperm.xlu0 %194, %v185
    %v196 = vpop.permute.xlu0 %195
    %199 = vset.pattern.permute.xlu0 0
    %200 = vperm.xlu0 %199, %v186
    %v201 = vpop.permute.xlu0 %200
    %204 = vset.pattern.permute.xlu0 0
    %205 = vperm.xlu0 %204, %v187
    %v206 = vpop.permute.xlu0 %205
    %vm208 = vcmask 195584
    %v210 = vsel %vm208, %v177, 0
    %v213 = vsel %vm208, %v178, 0
    %v216 = vsel %vm208, %v179, 0
    %v219 = vsel %vm208, %v180, 0
    %221 = vmatprep.subr.mxu0 0.0
    %222 = vmatpush1.msra.mxu0 %v181
    %223 = vmatprep.subr.mxu0 0.0
    %224 = vmatpush1.msra.mxu0 %v182
    %225 = vmatprep.subr.mxu0 0.0
    %226 = vmatpush1.msra.mxu0 %v183
    %227 = vmatprep.subr.mxu0 0.0
    %228 = vmatpush1.msra.mxu0 0.0
    %229 = vmatprep.subr.mxu0 0.0
    %230 = vmatpush1.msra.mxu0 0.0
    %231 = vmatprep.subr.mxu0 0.0
    %232 = vmatpush1.msra.mxu0 0.0
    %233 = vmatprep.subr.mxu0 0.0
    %234 = vmatpush1.msra.mxu0 0.0
    %235 = vmatprep.subr.mxu0 0.0
    %236 = vmatpush1.msra.mxu0 0.0
    %237 = vmatprep.subr.mxu0 0.0
    %238 = vmatpush1.msra.mxu0 0.0
    %239 = vmatprep.subr.mxu0 0.0
    %240 = vmatpush1.msra.mxu0 0.0
    %241 = vmatprep.subr.mxu0 0.0
    %242 = vmatpush1.msra.mxu0 0.0
    %243 = vmatprep.subr.mxu0 0.0
    %244 = vmatpush1.msra.mxu0 0.0
    %245 = vmatprep.subr.mxu0 0.0
    %246 = vmatpush1.msra.mxu0 0.0
    %247 = vmatprep.subr.mxu0 0.0
    %248 = vmatpush1.msra.mxu0 0.0
    %249 = vmatprep.subr.mxu0 0.0
    %250 = vmatpush1.msra.mxu0 0.0
    %251 = vmatprep.subr.mxu0 0.0
    %252 = vmatpush1.msra.mxu0 0.0
    %253 = vmatprep.subr.mxu0 0.0
    %254 = vmatpush1.msra.mxu0 0.0
    %255 = vmatprep.subr.mxu0 0.0
    %256 = vmatpush1.msra.mxu0 0.0
    %257 = vmatprep.subr.mxu0 0.0
    %258 = vmatpush1.msra.mxu0 0.0
    %259 = vmatprep.subr.mxu0 0.0
    %260 = vmatpush1.msra.mxu0 0.0
    %261 = vmatprep.subr.mxu0 0.0
    %262 = vmatpush1.msra.mxu0 0.0
    %263 = vmatprep.subr.mxu0 0.0
    %264 = vmatpush1.msra.mxu0 0.0
    %265 = vmatprep.subr.mxu0 0.0
    %266 = vmatpush1.msra.mxu0 0.0
    %267 = vmatprep.subr.mxu0 0.0
    %268 = vmatpush1.msra.mxu0 0.0
    %269 = vmatprep.subr.mxu0 0.0
    %270 = vmatpush1.msra.mxu0 0.0
    %271 = vmatprep.subr.mxu0 0.0
    %272 = vmatpush1.msra.mxu0 0.0
    %273 = vmatprep.subr.mxu0 0.0
    %274 = vmatpush1.msra.mxu0 0.0
    %275 = vmatprep.subr.mxu0 0.0
    %276 = vmatpush1.msra.mxu0 0.0
    %277 = vmatprep.subr.mxu0 0.0
    %278 = vmatpush1.msra.mxu0 0.0
    %279 = vmatprep.subr.mxu0 0.0
    %280 = vmatpush1.msra.mxu0 0.0
    %281 = vmatprep.subr.mxu0 0.0
    %282 = vmatpush1.msra.mxu0 0.0
    %283 = vmatprep.subr.mxu0 0.0
    %284 = vmatpush1.msra.mxu0 0.0
    %285 = vmatprep.mubr.f32.mxu0 0.0
    %286 = vmatmul.mubr.f32.gmra.mrb[0].mxu0 %v210
    %v287 = vpop.f32.mrb[0].mxu0
    %v288 = vadd.f32 %v191, %v287
    %v289 = vpop.f32.mrb[0].mxu0
    %290 = vmatprep.mubr.f32.mxu0 0.0
    %291 = vmatmul.mubr.f32.gmra.mrb[0].mxu0 %v213
    %v292 = vpop.f32.mrb[0].mxu0
    %v293 = vadd.f32 %v196, %v292
    %v294 = vpop.f32.mrb[0].mxu0
    %295 = vmatprep.mubr.f32.mxu0 0.0
    %296 = vmatmul.mubr.f32.gmra.mrb[0].mxu0 %v216
    %v297 = vpop.f32.mrb[0].mxu0
    %v298 = vadd.f32 %v201, %v297
    %v299 = vpop.f32.mrb[0].mxu0
    %300 = vmatprep.mubr.f32.mxu0 0.0
    %301 = vmatmul.mubr.f32.gmra.mrb[0].mxu0 %v219
    %v302 = vpop.f32.mrb[0].mxu0
    %v303 = vadd.f32 %v206, %v302
    %v304 = vpop.f32.mrb[0].mxu0
    %305 = vdwg.mxu0
    %v306 = vmul.f32 %v159, %v288
    %v307 = vmul.f32 %v164, %v293
    %v308 = vmul.f32 %v169, %v298
    %v309 = vmul.f32 %v174, %v303
    %v310 = vld [vmem:[%s6] sm:$0xff]
    %v311 = vld [vmem:[%s6 + $0x8] sm:$0xff]
    %v312 = vld [vmem:[%s6 + $0x10] sm:$0xff]
    %v313 = vld [vmem:[%s6 + $0x18] sm:$0xff]
    %v314 = vld [vmem:[%s7] sm:$0xff]
    %v315 = vld [vmem:[%s7 + $0x8] sm:$0xff]
    %v316 = vld [vmem:[%s7 + $0x10] sm:$0xff]
    %v317 = vld [vmem:[%s7 + $0x18] sm:$0xff]
    %vm318 = vcmask 261120
    %v320 = vsel %vm318, %v314, 0
    %v323 = vsel %vm318, %v315, 0
    %v326 = vsel %vm318, %v316, 0
    %v329 = vsel %vm318, %v317, 0
    %331 = vmatprep.subr.mxu0 0.0
    %332 = vmatpush1.msra.mxu0 %v159
    %333 = vmatprep.subr.mxu0 0.0
    %334 = vmatpush1.msra.mxu0 %v164
    %335 = vmatprep.subr.mxu0 0.0
    %336 = vmatpush1.msra.mxu0 %v169
    %337 = vmatprep.subr.mxu0 0.0
    %338 = vmatpush1.msra.mxu0 %v174
    %339 = vmatprep.subr.mxu0 0.0
    %340 = vmatpush1.msra.mxu0 0.0
    %341 = vmatprep.subr.mxu0 0.0
    %342 = vmatpush1.msra.mxu0 0.0
    %343 = vmatprep.subr.mxu0 0.0
    %344 = vmatpush1.msra.mxu0 0.0
    %345 = vmatprep.subr.mxu0 0.0
    %346 = vmatpush1.msra.mxu0 0.0
    %347 = vmatprep.subr.mxu0 0.0
    %348 = vmatpush1.msra.mxu0 0.0
    %349 = vmatprep.subr.mxu0 0.0
    %350 = vmatpush1.msra.mxu0 0.0
    %351 = vmatprep.subr.mxu0 0.0
    %352 = vmatpush1.msra.mxu0 0.0
    %353 = vmatprep.subr.mxu0 0.0
    %354 = vmatpush1.msra.mxu0 0.0
    %355 = vmatprep.subr.mxu0 0.0
    %356 = vmatpush1.msra.mxu0 0.0
    %357 = vmatprep.subr.mxu0 0.0
    %358 = vmatpush1.msra.mxu0 0.0
    %359 = vmatprep.subr.mxu0 0.0
    %360 = vmatpush1.msra.mxu0 0.0
    %361 = vmatprep.subr.mxu0 0.0
    %362 = vmatpush1.msra.mxu0 0.0
    %363 = vmatprep.subr.mxu0 0.0
    %364 = vmatpush1.msra.mxu0 0.0
    %365 = vmatprep.subr.mxu0 0.0
    %366 = vmatpush1.msra.mxu0 0.0
    %367 = vmatprep.subr.mxu0 0.0
    %368 = vmatpush1.msra.mxu0 0.0
    %369 = vmatprep.subr.mxu0 0.0
    %370 = vmatpush1.msra.mxu0 0.0
    %371 = vmatprep.subr.mxu0 0.0
    %372 = vmatpush1.msra.mxu0 0.0
    %373 = vmatprep.subr.mxu0 0.0
    %374 = vmatpush1.msra.mxu0 0.0
    %375 = vmatprep.subr.mxu0 0.0
    %376 = vmatpush1.msra.mxu0 0.0
    %377 = vmatprep.subr.mxu0 0.0
    %378 = vmatpush1.msra.mxu0 0.0
    %379 = vmatprep.subr.mxu0 0.0
    %380 = vmatpush1.msra.mxu0 0.0
    %381 = vmatprep.subr.mxu0 0.0
    %382 = vmatpush1.msra.mxu0 0.0
    %383 = vmatprep.subr.mxu0 0.0
    %384 = vmatpush1.msra.mxu0 0.0
    %385 = vmatprep.subr.mxu0 0.0
    %386 = vmatpush1.msra.mxu0 0.0
    %387 = vmatprep.subr.mxu0 0.0
    %388 = vmatpush1.msra.mxu0 0.0
    %389 = vmatprep.subr.mxu0 0.0
    %390 = vmatpush1.msra.mxu0 0.0
    %391 = vmatprep.subr.mxu0 0.0
    %392 = vmatpush1.msra.mxu0 0.0
    %393 = vmatprep.subr.mxu0 0.0
    %394 = vmatpush1.msra.mxu0 0.0
    %395 = vmatprep.mubr.f32.mxu0 0.0
    %396 = vmatmul.mubr.f32.gmra.mrb[0].mxu0 %v320
    %v397 = vpop.f32.mrb[0].mxu0
    %v398 = vadd.f32 0.0, %v397
    %v399 = vpop.f32.mrb[0].mxu0
    %400 = vmatprep.mubr.f32.mxu0 0.0
    %401 = vmatmul.mubr.f32.gmra.mrb[0].mxu0 %v323
    %v402 = vpop.f32.mrb[0].mxu0
    %v403 = vadd.f32 0.0, %v402
    %v404 = vpop.f32.mrb[0].mxu0
    %405 = vmatprep.mubr.f32.mxu0 0.0
    %406 = vmatmul.mubr.f32.gmra.mrb[0].mxu0 %v326
    %v407 = vpop.f32.mrb[0].mxu0
    %v408 = vadd.f32 0.0, %v407
    %v409 = vpop.f32.mrb[0].mxu0
    %410 = vmatprep.mubr.f32.mxu0 0.0
    %411 = vmatmul.mubr.f32.gmra.mrb[0].mxu0 %v329
    %v412 = vpop.f32.mrb[0].mxu0
    %v413 = vadd.f32 0.0, %v412
    %v414 = vpop.f32.mrb[0].mxu0
    %415 = vdwg.mxu0
    %v417 = vsel %vm318, %v310, 0
    %v420 = vsel %vm318, %v311, 0
    %v423 = vsel %vm318, %v312, 0
    %v426 = vsel %vm318, %v313, 0
    %428 = vmatprep.subr.mxu0 0.0
    %429 = vmatpush1.msra.mxu0 %v306
    %430 = vmatprep.subr.mxu0 0.0
    %431 = vmatpush1.msra.mxu0 %v307
    %432 = vmatprep.subr.mxu0 0.0
    %433 = vmatpush1.msra.mxu0 %v308
    %434 = vmatprep.subr.mxu0 0.0
    %435 = vmatpush1.msra.mxu0 %v309
    %436 = vmatprep.subr.mxu0 0.0
    %437 = vmatpush1.msra.mxu0 0.0
    %438 = vmatprep.subr.mxu0 0.0
    %439 = vmatpush1.msra.mxu0 0.0
    %440 = vmatprep.subr.mxu0 0.0
    %441 = vmatpush1.msra.mxu0 0.0
    %442 = vmatprep.subr.mxu0 0.0
    %443 = vmatpush1.msra.mxu0 0.0
    %444 = vmatprep.subr.mxu0 0.0
    %445 = vmatpush1.msra.mxu0 0.0
    %446 = vmatprep.subr.mxu0 0.0
    %447 = vmatpush1.msra.mxu0 0.0
    %448 = vmatprep.subr.mxu0 0.0
    %449 = vmatpush1.msra.mxu0 0.0
    %450 = vmatprep.subr.mxu0 0.0
    %451 = vmatpush1.msra.mxu0 0.0
    %452 = vmatprep.subr.mxu0 0.0
    %453 = vmatpush1.msra.mxu0 0.0
    %454 = vmatprep.subr.mxu0 0.0
    %455 = vmatpush1.msra.mxu0 0.0
    %456 = vmatprep.subr.mxu0 0.0
    %457 = vmatpush1.msra.mxu0 0.0
    %458 = vmatprep.subr.mxu0 0.0
    %459 = vmatpush1.msra.mxu0 0.0
    %460 = vmatprep.subr.mxu0 0.0
    %461 = vmatpush1.msra.mxu0 0.0
    %462 = vmatprep.subr.mxu0 0.0
    %463 = vmatpush1.msra.mxu0 0.0
    %464 = vmatprep.subr.mxu0 0.0
    %465 = vmatpush1.msra.mxu0 0.0
    %466 = vmatprep.subr.mxu0 0.0
    %467 = vmatpush1.msra.mxu0 0.0
    %468 = vmatprep.subr.mxu0 0.0
    %469 = vmatpush1.msra.mxu0 0.0
    %470 = vmatprep.subr.mxu0 0.0
    %471 = vmatpush1.msra.mxu0 0.0
    %472 = vmatprep.subr.mxu0 0.0
    %473 = vmatpush1.msra.mxu0 0.0
    %474 = vmatprep.subr.mxu0 0.0
    %475 = vmatpush1.msra.mxu0 0.0
    %476 = vmatprep.subr.mxu0 0.0
    %477 = vmatpush1.msra.mxu0 0.0
    %478 = vmatprep.subr.mxu0 0.0
    %479 = vmatpush1.msra.mxu0 0.0
    %480 = vmatprep.subr.mxu0 0.0
    %481 = vmatpush1.msra.mxu0 0.0
    %482 = vmatprep.subr.mxu0 0.0
    %483 = vmatpush1.msra.mxu0 0.0
    %484 = vmatprep.subr.mxu0 0.0
    %485 = vmatpush1.msra.mxu0 0.0
    %486 = vmatprep.subr.mxu0 0.0
    %487 = vmatpush1.msra.mxu0 0.0
    %488 = vmatprep.subr.mxu0 0.0
    %489 = vmatpush1.msra.mxu0 0.0
    %490 = vmatprep.subr.mxu0 0.0
    %491 = vmatpush1.msra.mxu0 0.0
    %492 = vmatprep.mubr.f32.mxu0 0.0
    %493 = vmatmul.mubr.f32.gmra.mrb[0].mxu0 %v417
    %v494 = vpop.f32.mrb[0].mxu0
    %v495 = vadd.f32 %v398, %v494
    %v496 = vpop.f32.mrb[0].mxu0
    %497 = vmatprep.mubr.f32.mxu0 0.0
    %498 = vmatmul.mubr.f32.gmra.mrb[0].mxu0 %v420
    %v499 = vpop.f32.mrb[0].mxu0
    %v500 = vadd.f32 %v403, %v499
    %v501 = vpop.f32.mrb[0].mxu0
    %502 = vmatprep.mubr.f32.mxu0 0.0
    %503 = vmatmul.mubr.f32.gmra.mrb[0].mxu0 %v423
    %v504 = vpop.f32.mrb[0].mxu0
    %v505 = vadd.f32 %v408, %v504
    %v506 = vpop.f32.mrb[0].mxu0
    %507 = vmatprep.mubr.f32.mxu0 0.0
    %508 = vmatmul.mubr.f32.gmra.mrb[0].mxu0 %v426
    %v509 = vpop.f32.mrb[0].mxu0
    %v510 = vadd.f32 %v413, %v509
    %v511 = vpop.f32.mrb[0].mxu0
    %512 = vdwg.mxu0
    %v513 = vld [vmem:[%s8] sm:$0xff]
    %v514 = vld [vmem:[%s8 + $0x8] sm:$0xff]
    %v515 = vld [vmem:[%s8 + $0x10] sm:$0xff]
    %v516 = vld [vmem:[%s8 + $0x18] sm:$0xff]
    %v518 = vsel %vm318, %v513, 0
    %v521 = vsel %vm318, %v514, 0
    %v524 = vsel %vm318, %v515, 0
    %v527 = vsel %vm318, %v516, 0
    %529 = vmatprep.subr.mxu0 0.0
    %530 = vmatpush1.msra.mxu0 %v288
    %531 = vmatprep.subr.mxu0 0.0
    %532 = vmatpush1.msra.mxu0 %v293
    %533 = vmatprep.subr.mxu0 0.0
    %534 = vmatpush1.msra.mxu0 %v298
    %535 = vmatprep.subr.mxu0 0.0
    %536 = vmatpush1.msra.mxu0 %v303
    %537 = vmatprep.subr.mxu0 0.0
    %538 = vmatpush1.msra.mxu0 0.0
    %539 = vmatprep.subr.mxu0 0.0
    %540 = vmatpush1.msra.mxu0 0.0
    %541 = vmatprep.subr.mxu0 0.0
    %542 = vmatpush1.msra.mxu0 0.0
    %543 = vmatprep.subr.mxu0 0.0
    %544 = vmatpush1.msra.mxu0 0.0
    %545 = vmatprep.subr.mxu0 0.0
    %546 = vmatpush1.msra.mxu0 0.0
    %547 = vmatprep.subr.mxu0 0.0
    %548 = vmatpush1.msra.mxu0 0.0
    %549 = vmatprep.subr.mxu0 0.0
    %550 = vmatpush1.msra.mxu0 0.0
    %551 = vmatprep.subr.mxu0 0.0
    %552 = vmatpush1.msra.mxu0 0.0
    %553 = vmatprep.subr.mxu0 0.0
    %554 = vmatpush1.msra.mxu0 0.0
    %555 = vmatprep.subr.mxu0 0.0
    %556 = vmatpush1.msra.mxu0 0.0
    %557 = vmatprep.subr.mxu0 0.0
    %558 = vmatpush1.msra.mxu0 0.0
    %559 = vmatprep.subr.mxu0 0.0
    %560 = vmatpush1.msra.mxu0 0.0
    %561 = vmatprep.subr.mxu0 0.0
    %562 = vmatpush1.msra.mxu0 0.0
    %563 = vmatprep.subr.mxu0 0.0
    %564 = vmatpush1.msra.mxu0 0.0
    %565 = vmatprep.subr.mxu0 0.0
    %566 = vmatpush1.msra.mxu0 0.0
    %567 = vmatprep.subr.mxu0 0.0
    %568 = vmatpush1.msra.mxu0 0.0
    %569 = vmatprep.subr.mxu0 0.0
    %570 = vmatpush1.msra.mxu0 0.0
    %571 = vmatprep.subr.mxu0 0.0
    %572 = vmatpush1.msra.mxu0 0.0
    %573 = vmatprep.subr.mxu0 0.0
    %574 = vmatpush1.msra.mxu0 0.0
    %575 = vmatprep.subr.mxu0 0.0
    %576 = vmatpush1.msra.mxu0 0.0
    %577 = vmatprep.subr.mxu0 0.0
    %578 = vmatpush1.msra.mxu0 0.0
    %579 = vmatprep.subr.mxu0 0.0
    %580 = vmatpush1.msra.mxu0 0.0
    %581 = vmatprep.subr.mxu0 0.0
    %582 = vmatpush1.msra.mxu0 0.0
    %583 = vmatprep.subr.mxu0 0.0
    %584 = vmatpush1.msra.mxu0 0.0
    %585 = vmatprep.subr.mxu0 0.0
    %586 = vmatpush1.msra.mxu0 0.0
    %587 = vmatprep.subr.mxu0 0.0
    %588 = vmatpush1.msra.mxu0 0.0
    %589 = vmatprep.subr.mxu0 0.0
    %590 = vmatpush1.msra.mxu0 0.0
    %591 = vmatprep.subr.mxu0 0.0
    %592 = vmatpush1.msra.mxu0 0.0
    %593 = vmatprep.mubr.f32.mxu0 0.0
    %594 = vmatmul.mubr.f32.gmra.mrb[0].mxu0 %v518
    %v595 = vpop.f32.mrb[0].mxu0
    %v596 = vadd.f32 0.0, %v595
    %v597 = vpop.f32.mrb[0].mxu0
    %598 = vmatprep.mubr.f32.mxu0 0.0
    %599 = vmatmul.mubr.f32.gmra.mrb[0].mxu0 %v521
    %v600 = vpop.f32.mrb[0].mxu0
    %v601 = vadd.f32 0.0, %v600
    %v602 = vpop.f32.mrb[0].mxu0
    %603 = vmatprep.mubr.f32.mxu0 0.0
    %604 = vmatmul.mubr.f32.gmra.mrb[0].mxu0 %v524
    %v605 = vpop.f32.mrb[0].mxu0
    %v606 = vadd.f32 0.0, %v605
    %v607 = vpop.f32.mrb[0].mxu0
    %608 = vmatprep.mubr.f32.mxu0 0.0
    %609 = vmatmul.mubr.f32.gmra.mrb[0].mxu0 %v527
    %v610 = vpop.f32.mrb[0].mxu0
    %v611 = vadd.f32 0.0, %v610
    %v612 = vpop.f32.mrb[0].mxu0
    %613 = vdwg.mxu0
    %v614 = vadd.f32 %v495, %v596
    %v615 = vadd.f32 %v500, %v601
    %v616 = vadd.f32 %v505, %v606
    %v617 = vadd.f32 %v510, %v611
    %v618 = vld [vmem:[%s9] sm:$0xff]
    %v619 = vld [vmem:[%s9 + $0x8] sm:$0xff]
    %v620 = vld [vmem:[%s9 + $0x10] sm:$0xff]
    %v621 = vld [vmem:[%s9 + $0x18] sm:$0xff]
    %623 = vset.pattern.permute.xlu0 0
    %624 = vperm.xlu0 %623, %v618
    %v625 = vpop.permute.xlu0 %624
    %628 = vset.pattern.permute.xlu0 0
    %629 = vperm.xlu0 %628, %v619
    %v630 = vpop.permute.xlu0 %629
    %633 = vset.pattern.permute.xlu0 0
    %634 = vperm.xlu0 %633, %v620
    %v635 = vpop.permute.xlu0 %634
    %638 = vset.pattern.permute.xlu0 0
    %639 = vperm.xlu0 %638, %v621
    %v640 = vpop.permute.xlu0 %639
    %v642 = vadd.f32 %v614, %v625
    %v643 = vadd.f32 %v615, %v630
    %v644 = vadd.f32 %v616, %v635
    %v645 = vadd.f32 %v617, %v640
    %v646 = vmax.f32 %v642, 0.0
    %v647 = vmax.f32 %v643, 0.0
    %v648 = vmax.f32 %v644, 0.0
    %v649 = vmax.f32 %v645, 0.0
    %v650 = vld [vmem:[%s10] sm:$0xff]
    %v651 = vld [vmem:[%s10 + $0x8] sm:$0xff]
    %v652 = vld [vmem:[%s11] sm:$0xff]
    %v653 = vld [vmem:[%s11 + $0x8] sm:$0xff]
    %655 = vset.pattern.permute.xlu0 0
    %656 = vperm.xlu0 %655, %v652
    %v657 = vpop.permute.xlu0 %656
    %660 = vset.pattern.permute.xlu0 0
    %661 = vperm.xlu0 %660, %v653
    %v662 = vpop.permute.xlu0 %661
    %v665 = vsel %vm318, %v650, 0
    %v668 = vsel %vm318, %v651, 0
    %670 = vmatprep.subr.mxu0 0.0
    %671 = vmatpush1.msra.mxu0 %v646
    %672 = vmatprep.subr.mxu0 0.0
    %673 = vmatpush1.msra.mxu0 %v647
    %674 = vmatprep.subr.mxu0 0.0
    %675 = vmatpush1.msra.mxu0 %v648
    %676 = vmatprep.subr.mxu0 0.0
    %677 = vmatpush1.msra.mxu0 %v649
    %678 = vmatprep.subr.mxu0 0.0
    %679 = vmatpush1.msra.mxu0 0.0
    %680 = vmatprep.subr.mxu0 0.0
    %681 = vmatpush1.msra.mxu0 0.0
    %682 = vmatprep.subr.mxu0 0.0
    %683 = vmatpush1.msra.mxu0 0.0
    %684 = vmatprep.subr.mxu0 0.0
    %685 = vmatpush1.msra.mxu0 0.0
    %686 = vmatprep.subr.mxu0 0.0
    %687 = vmatpush1.msra.mxu0 0.0
    %688 = vmatprep.subr.mxu0 0.0
    %689 = vmatpush1.msra.mxu0 0.0
    %690 = vmatprep.subr.mxu0 0.0
    %691 = vmatpush1.msra.mxu0 0.0
    %692 = vmatprep.subr.mxu0 0.0
    %693 = vmatpush1.msra.mxu0 0.0
    %694 = vmatprep.subr.mxu0 0.0
    %695 = vmatpush1.msra.mxu0 0.0
    %696 = vmatprep.subr.mxu0 0.0
    %697 = vmatpush1.msra.mxu0 0.0
    %698 = vmatprep.subr.mxu0 0.0
    %699 = vmatpush1.msra.mxu0 0.0
    %700 = vmatprep.subr.mxu0 0.0
    %701 = vmatpush1.msra.mxu0 0.0
    %702 = vmatprep.subr.mxu0 0.0
    %703 = vmatpush1.msra.mxu0 0.0
    %704 = vmatprep.subr.mxu0 0.0
    %705 = vmatpush1.msra.mxu0 0.0
    %706 = vmatprep.subr.mxu0 0.0
    %707 = vmatpush1.msra.mxu0 0.0
    %708 = vmatprep.subr.mxu0 0.0
    %709 = vmatpush1.msra.mxu0 0.0
    %710 = vmatprep.subr.mxu0 0.0
    %711 = vmatpush1.msra.mxu0 0.0
    %712 = vmatprep.subr.mxu0 0.0
    %713 = vmatpush1.msra.mxu0 0.0
    %714 = vmatprep.subr.mxu0 0.0
    %715 = vmatpush1.msra.mxu0 0.0
    %716 = vmatprep.subr.mxu0 0.0
    %717 = vmatpush1.msra.mxu0 0.0
    %718 = vmatprep.subr.mxu0 0.0
    %719 = vmatpush1.msra.mxu0 0.0
    %720 = vmatprep.subr.mxu0 0.0
    %721 = vmatpush1.msra.mxu0 0.0
    %722 = vmatprep.subr.mxu0 0.0
    %723 = vmatpush1.msra.mxu0 0.0
    %724 = vmatprep.subr.mxu0 0.0
    %725 = vmatpush1.msra.mxu0 0.0
    %726 = vmatprep.subr.mxu0 0.0
    %727 = vmatpush1.msra.mxu0 0.0
    %728 = vmatprep.subr.mxu0 0.0
    %729 = vmatpush1.msra.mxu0 0.0
    %730 = vmatprep.subr.mxu0 0.0
    %731 = vmatpush1.msra.mxu0 0.0
    %732 = vmatprep.subr.mxu0 0.0
    %733 = vmatpush1.msra.mxu0 0.0
    %734 = vmatprep.mubr.f32.mxu0 0.0
    %735 = vmatmul.mubr.f32.gmra.mrb[0].mxu0 %v665
    %v736 = vpop.f32.mrb[0].mxu0
    %v737 = vadd.f32 %v657, %v736
    %v738 = vpop.f32.mrb[0].mxu0
    %739 = vmatprep.mubr.f32.mxu0 0.0
    %740 = vmatmul.mubr.f32.gmra.mrb[0].mxu0 %v668
    %v741 = vpop.f32.mrb[0].mxu0
    %v742 = vadd.f32 %v662, %v741
    %v743 = vpop.f32.mrb[0].mxu0
    %744 = vdwg.mxu0
    %v745 = vmax.f32 %v737, 0.0
    %v746 = vmax.f32 %v742, 0.0
    %v747 = vld [vmem:[%s12] sm:$0x1]
    %s748 = sld [smem:[#allocation2]]
    %v749 = vstv %s748
    %v751 = vsel %vm79, %v747, 0
    %753 = vmatprep.subr.mxu0 0.0
    %754 = vmatpush1.msra.mxu0 %v745
    %755 = vmatprep.subr.mxu0 0.0
    %756 = vmatpush1.msra.mxu0 %v746
    %757 = vmatprep.subr.mxu0 0.0
    %758 = vmatpush1.msra.mxu0 0.0
    %759 = vmatprep.subr.mxu0 0.0
    %760 = vmatpush1.msra.mxu0 0.0
    %761 = vmatprep.subr.mxu0 0.0
    %762 = vmatpush1.msra.mxu0 0.0
    %763 = vmatprep.subr.mxu0 0.0
    %764 = vmatpush1.msra.mxu0 0.0
    %765 = vmatprep.subr.mxu0 0.0
    %766 = vmatpush1.msra.mxu0 0.0
    %767 = vmatprep.subr.mxu0 0.0
    %768 = vmatpush1.msra.mxu0 0.0
    %769 = vmatprep.subr.mxu0 0.0
    %770 = vmatpush1.msra.mxu0 0.0
    %771 = vmatprep.subr.mxu0 0.0
    %772 = vmatpush1.msra.mxu0 0.0
    %773 = vmatprep.subr.mxu0 0.0
    %774 = vmatpush1.msra.mxu0 0.0
    %775 = vmatprep.subr.mxu0 0.0
    %776 = vmatpush1.msra.mxu0 0.0
    %777 = vmatprep.subr.mxu0 0.0
    %778 = vmatpush1.msra.mxu0 0.0
    %779 = vmatprep.subr.mxu0 0.0
    %780 = vmatpush1.msra.mxu0 0.0
    %781 = vmatprep.subr.mxu0 0.0
    %782 = vmatpush1.msra.mxu0 0.0
    %783 = vmatprep.subr.mxu0 0.0
    %784 = vmatpush1.msra.mxu0 0.0
    %785 = vmatprep.subr.mxu0 0.0
    %786 = vmatpush1.msra.mxu0 0.0
    %787 = vmatprep.subr.mxu0 0.0
    %788 = vmatpush1.msra.mxu0 0.0
    %789 = vmatprep.subr.mxu0 0.0
    %790 = vmatpush1.msra.mxu0 0.0
    %791 = vmatprep.subr.mxu0 0.0
    %792 = vmatpush1.msra.mxu0 0.0
    %793 = vmatprep.subr.mxu0 0.0
    %794 = vmatpush1.msra.mxu0 0.0
    %795 = vmatprep.subr.mxu0 0.0
    %796 = vmatpush1.msra.mxu0 0.0
    %797 = vmatprep.subr.mxu0 0.0
    %798 = vmatpush1.msra.mxu0 0.0
    %799 = vmatprep.subr.mxu0 0.0
    %800 = vmatpush1.msra.mxu0 0.0
    %801 = vmatprep.subr.mxu0 0.0
    %802 = vmatpush1.msra.mxu0 0.0
    %803 = vmatprep.subr.mxu0 0.0
    %804 = vmatpush1.msra.mxu0 0.0
    %805 = vmatprep.subr.mxu0 0.0
    %806 = vmatpush1.msra.mxu0 0.0
    %807 = vmatprep.subr.mxu0 0.0
    %808 = vmatpush1.msra.mxu0 0.0
    %809 = vmatprep.subr.mxu0 0.0
    %810 = vmatpush1.msra.mxu0 0.0
    %811 = vmatprep.subr.mxu0 0.0
    %812 = vmatpush1.msra.mxu0 0.0
    %813 = vmatprep.subr.mxu0 0.0
    %814 = vmatpush1.msra.mxu0 0.0
    %815 = vmatprep.subr.mxu0 0.0
    %816 = vmatpush1.msra.mxu0 0.0
    %817 = vmatprep.mubr.f32.mxu0 0.0
    %818 = vmatmul.mubr.f32.gmra.mrb[0].mxu0 %v751
    %v819 = vpop.f32.mrb[0].mxu0
    %v820 = vadd.f32 %v749, %v819
    %v821 = vpop.f32.mrb[0].mxu0
    %822 = vdwg.mxu0
    %vm823 = vcmask 57344
    %824 = vst.msk [vmem:[#allocation3] sm:$0x1] %vm823, %v820
    // Predicated region
    $region58: #{tpu_custom_call.1} parent=1 // pred_check
      _
    $region59: #{tpu_custom_call.1} parent=1 // pred_check_branch
      %826 = sbr.rel (0) target = $region61
    $region60: #{tpu_custom_call.1} parent=1 // pred_region
      %s828 = ssub.s32 16, 16
      %829 = vsyncadd [#allocation4], %s828
      %s831 = sshll.u32 [#allocation3], 4
      %s832 = int_to_ptr.vmem [resolvable:$true] %s831
      %834 = dma.vmem_to_hbm [thread:$0]  %s832, 16, %s14, [#allocation4]
    $region61: #{tpu_custom_call.1} parent=1 // pred_fallthru
      _
    // Predicated region
    $region62: #{tpu_custom_call.1} parent=1 // pred_check
      _
    $region63: #{tpu_custom_call.1} parent=1 // pred_check_branch
      %836 = sbr.rel (0) target = $region65
    $region64: #{tpu_custom_call.1} parent=1 // pred_region
      %837 = dma.done [#allocation4], 16
    $region65: #{tpu_custom_call.1} parent=1 // pred_fallthru
      _
    %838 = vsyncpa [#allocation4], 1

// kernel: tpu_custom_call.1
$region0: #{tpu_custom_call.1}
  #allocation0 [shape = 'u32[]', space=smem, size = 0x4, offset = 0x4, fixed_abs, tag = 'smem constant byte address 0x4 - core index']
  #allocation1 [shape = 'u32[144,128]{1,0:T(1,128)}', space=vmem, size = 0x12000, scoped, tag = 'internal scratch']
  #allocation2 [shape = 'f32[1,1]{1,0:T(1,128)S(6)}', space=smem, size = 0x200, scoped, tag = 'scoped memory for tpu_custom_call.1']
  %s0 = inlined_call_operand.vmem [shape: f32[16,8], index: 0, kind: input, shape index: {}]
  %s1 = inlined_call_operand.vmem [shape: f32[24,8], index: 1, kind: input, shape index: {}]
  %s2 = inlined_call_operand.vmem [shape: f32[32,16], index: 2, kind: input, shape index: {}]
  %s3 = inlined_call_operand.vmem [shape: f32[32,1], index: 3, kind: input, shape index: {}]
  %s4 = inlined_call_operand.vmem [shape: f32[32,24], index: 4, kind: input, shape index: {}]
  %s5 = inlined_call_operand.vmem [shape: f32[32,1], index: 5, kind: input, shape index: {}]
  %s6 = inlined_call_operand.vmem [shape: f32[32,32], index: 6, kind: input, shape index: {}]
  %s7 = inlined_call_operand.vmem [shape: f32[32,32], index: 7, kind: input, shape index: {}]
  %s8 = inlined_call_operand.vmem [shape: f32[32,32], index: 8, kind: input, shape index: {}]
  %s9 = inlined_call_operand.vmem [shape: f32[32,1], index: 9, kind: input, shape index: {}]
  %s10 = inlined_call_operand.vmem [shape: f32[16,32], index: 10, kind: input, shape index: {}]
  %s11 = inlined_call_operand.vmem [shape: f32[16,1], index: 11, kind: input, shape index: {}]
  %s12 = inlined_call_operand.vmem [shape: f32[1,16], index: 12, kind: input, shape index: {}]
  %s13 = inlined_call_operand.<no memory space> [shape: f32[1,1], index: 13, kind: input, shape index: {}]
  %s14 = inlined_call_operand.hbm [shape: f32[1,8], index: 14, kind: output, shape index: {}]
  %s15 = sld [smem:[#allocation0]]
  $region66: #{tpu_custom_call.1} parent=0
    _
  %s17 = ssub.s32 1, %s15
  %s18 = scalar_select 0, %s17, %s15
  %19 = sst [smem:[#allocation2]] %s13
  $region1: #{tpu_custom_call.1} parent=0
    #allocation3 [shape = 'u8[512]{0}', space=vmem, size = 0x400, scoped, tag = 'output window, operand 0, single buffered']
    #allocation4 [shape = 's32[1]{0}', space=sflag, size = 0x4, scoped, tag = 'scoped memory for tpu_custom_call.1']
    %20 = vsyncpa [#allocation4], 0
    // Predicated region
    $region2: #{tpu_custom_call.1} parent=1 // pred_check
      _
    $region3: #{tpu_custom_call.1} parent=1 // pred_check_branch
      %22 = sbr.rel (0) target = $region5
    $region4: #{tpu_custom_call.1} parent=1 // pred_region
      _
    $region5: #{tpu_custom_call.1} parent=1 // pred_fallthru
      _
    // Predicated region
    $region6: #{tpu_custom_call.1} parent=1 // pred_check
      _
    $region7: #{tpu_custom_call.1} parent=1 // pred_check_branch
      %24 = sbr.rel (0) target = $region9
    $region8: #{tpu_custom_call.1} parent=1 // pred_region
      _
    $region9: #{tpu_custom_call.1} parent=1 // pred_fallthru
      _
    // Predicated region
    $region10: #{tpu_custom_call.1} parent=1 // pred_check
      _
    $region11: #{tpu_custom_call.1} parent=1 // pred_check_branch
      %26 = sbr.rel (0) target = $region13
    $region12: #{tpu_custom_call.1} parent=1 // pred_region
      _
    $region13: #{tpu_custom_call.1} parent=1 // pred_fallthru
      _
    // Predicated region
    $region14: #{tpu_custom_call.1} parent=1 // pred_check
      _
    $region15: #{tpu_custom_call.1} parent=1 // pred_check_branch
      %28 = sbr.rel (0) target = $region17
    $region16: #{tpu_custom_call.1} parent=1 // pred_region
      _
    $region17: #{tpu_custom_call.1} parent=1 // pred_fallthru
      _
    // Predicated region
    $region18: #{tpu_custom_call.1} parent=1 // pred_check
      _
    $region19: #{tpu_custom_call.1} parent=1 // pred_check_branch
      %30 = sbr.rel (0) target = $region21
    $region20: #{tpu_custom_call.1} parent=1 // pred_region
      _
    $region21: #{tpu_custom_call.1} parent=1 // pred_fallthru
      _
    // Predicated region
    $region22: #{tpu_custom_call.1} parent=1 // pred_check
      _
    $region23: #{tpu_custom_call.1} parent=1 // pred_check_branch
      %32 = sbr.rel (0) target = $region25
    $region24: #{tpu_custom_call.1} parent=1 // pred_region
      _
    $region25: #{tpu_custom_call.1} parent=1 // pred_fallthru
      _
    // Predicated region
    $region26: #{tpu_custom_call.1} parent=1 // pred_check
      _
    $region27: #{tpu_custom_call.1} parent=1 // pred_check_branch
      %34 = sbr.rel (0) target = $region29
    $region28: #{tpu_custom_call.1} parent=1 // pred_region
      _
    $region29: #{tpu_custom_call.1} parent=1 // pred_fallthru
      _
    // Predicated region
    $region30: #{tpu_custom_call.1} parent=1 // pred_check
      _
    $region31: #{tpu_custom_call.1} parent=1 // pred_check_branch
      %36 = sbr.rel (0) target = $region33
    $region32: #{tpu_custom_call.1} parent=1 // pred_region
      _
    $region33: #{tpu_custom_call.1} parent=1 // pred_fallthru
      _
    // Predicated region
    $region34: #{tpu_custom_call.1} parent=1 // pred_check
      _
    $region35: #{tpu_custom_call.1} parent=1 // pred_check_branch
      %38 = sbr.rel (0) target = $region37
    $region36: #{tpu_custom_call.1} parent=1 // pred_region
      _
    $region37: #{tpu_custom_call.1} parent=1 // pred_fallthru
      _
    // Predicated region
    $region38: #{tpu_custom_call.1} parent=1 // pred_check
      _
    $region39: #{tpu_custom_call.1} parent=1 // pred_check_branch
      %40 = sbr.rel (0) target = $region41
    $region40: #{tpu_custom_call.1} parent=1 // pred_region
      _
    $region41: #{tpu_custom_call.1} parent=1 // pred_fallthru
      _
    // Predicated region
    $region42: #{tpu_custom_call.1} parent=1 // pred_check
      _
    $region43: #{tpu_custom_call.1} parent=1 // pred_check_branch
      %42 = sbr.rel (0) target = $region45
    $region44: #{tpu_custom_call.1} parent=1 // pred_region
      _
    $region45: #{tpu_custom_call.1} parent=1 // pred_fallthru
      _
    // Predicated region
    $region46: #{tpu_custom_call.1} parent=1 // pred_check
      _
    $region47: #{tpu_custom_call.1} parent=1 // pred_check_branch
      %44 = sbr.rel (0) target = $region49
    $region48: #{tpu_custom_call.1} parent=1 // pred_region
      _
    $region49: #{tpu_custom_call.1} parent=1 // pred_fallthru
      _
    // Predicated region
    $region50: #{tpu_custom_call.1} parent=1 // pred_check
      _
    $region51: #{tpu_custom_call.1} parent=1 // pred_check_branch
      %46 = sbr.rel (0) target = $region53
    $region52: #{tpu_custom_call.1} parent=1 // pred_region
      _
    $region53: #{tpu_custom_call.1} parent=1 // pred_fallthru
      _
    // Predicated region
    $region54: #{tpu_custom_call.1} parent=1 // pred_check
      _
    $region55: #{tpu_custom_call.1} parent=1 // pred_check_branch
      %48 = sbr.rel (0) target = $region57
    $region56: #{tpu_custom_call.1} parent=1 // pred_region
      _
    $region57: #{tpu_custom_call.1} parent=1 // pred_fallthru
      _
    %v49 = vld [vmem:[%s2] sm:$0xff]
    %v50 = vld [vmem:[%s2 + $0x8] sm:$0xff]
    %v51 = vld [vmem:[%s2 + $0x10] sm:$0xff]
    %v52 = vld [vmem:[%s2 + $0x18] sm:$0xff]
    %v53 = vld [vmem:[%s0] sm:$0xff]
    %v54 = vld [vmem:[%s0 + $0x8] sm:$0xff]
    %v55 = vld [vmem:[%s3] sm:$0xff]
    %v56 = vld [vmem:[%s3 + $0x8] sm:$0xff]
    %v57 = vld [vmem:[%s3 + $0x10] sm:$0xff]
    %v58 = vld [vmem:[%s3 + $0x18] sm:$0xff]
    %60 = vset.pattern.permute.xlu0 0
    %61 = vperm.xlu0 %60, %v55
    %v62 = vpop.permute.xlu0 %61
    %65 = vset.pattern.permute.xlu0 0
    %66 = vperm.xlu0 %65, %v56
    %v67 = vpop.permute.xlu0 %66
    %70 = vset.pattern.permute.xlu0 0
    %71 = vperm.xlu0 %70, %v57
    %v72 = vpop.permute.xlu0 %71
    %75 = vset.pattern.permute.xlu0 0
    %76 = vperm.xlu0 %75, %v58
    %v77 = vpop.permute.xlu0 %76
    %vm79 = vcmask 130048
    %v81 = vsel %vm79, %v49, 0
    %v84 = vsel %vm79, %v50, 0
    %v87 = vsel %vm79, %v51, 0
    %v90 = vsel %vm79, %v52, 0
    %92 = vmatprep.subr.mxu0 0.0
    %93 = vmatpush1.msra.mxu0 %v53
    %94 = vmatprep.subr.mxu0 0.0
    %95 = vmatpush1.msra.mxu0 %v54
    %96 = vmatprep.subr.mxu0 0.0
    %97 = vmatpush1.msra.mxu0 0.0
    %98 = vmatprep.subr.mxu0 0.0
    %99 = vmatpush1.msra.mxu0 0.0
    %100 = vmatprep.subr.mxu0 0.0
    %101 = vmatpush1.msra.mxu0 0.0
    %102 = vmatprep.subr.mxu0 0.0
    %103 = vmatpush1.msra.mxu0 0.0
    %104 = vmatprep.subr.mxu0 0.0
    %105 = vmatpush1.msra.mxu0 0.0
    %106 = vmatprep.subr.mxu0 0.0
    %107 = vmatpush1.msra.mxu0 0.0
    %108 = vmatprep.subr.mxu0 0.0
    %109 = vmatpush1.msra.mxu0 0.0
    %110 = vmatprep.subr.mxu0 0.0
    %111 = vmatpush1.msra.mxu0 0.0
    %112 = vmatprep.subr.mxu0 0.0
    %113 = vmatpush1.msra.mxu0 0.0
    %114 = vmatprep.subr.mxu0 0.0
    %115 = vmatpush1.msra.mxu0 0.0
    %116 = vmatprep.subr.mxu0 0.0
    %117 = vmatpush1.msra.mxu0 0.0
    %118 = vmatprep.subr.mxu0 0.0
    %119 = vmatpush1.msra.mxu0 0.0
    %120 = vmatprep.subr.mxu0 0.0
    %121 = vmatpush1.msra.mxu0 0.0
    %122 = vmatprep.subr.mxu0 0.0
    %123 = vmatpush1.msra.mxu0 0.0
    %124 = vmatprep.subr.mxu0 0.0
    %125 = vmatpush1.msra.mxu0 0.0
    %126 = vmatprep.subr.mxu0 0.0
    %127 = vmatpush1.msra.mxu0 0.0
    %128 = vmatprep.subr.mxu0 0.0
    %129 = vmatpush1.msra.mxu0 0.0
    %130 = vmatprep.subr.mxu0 0.0
    %131 = vmatpush1.msra.mxu0 0.0
    %132 = vmatprep.subr.mxu0 0.0
    %133 = vmatpush1.msra.mxu0 0.0
    %134 = vmatprep.subr.mxu0 0.0
    %135 = vmatpush1.msra.mxu0 0.0
    %136 = vmatprep.subr.mxu0 0.0
    %137 = vmatpush1.msra.mxu0 0.0
    %138 = vmatprep.subr.mxu0 0.0
    %139 = vmatpush1.msra.mxu0 0.0
    %140 = vmatprep.subr.mxu0 0.0
    %141 = vmatpush1.msra.mxu0 0.0
    %142 = vmatprep.subr.mxu0 0.0
    %143 = vmatpush1.msra.mxu0 0.0
    %144 = vmatprep.subr.mxu0 0.0
    %145 = vmatpush1.msra.mxu0 0.0
    %146 = vmatprep.subr.mxu0 0.0
    %147 = vmatpush1.msra.mxu0 0.0
    %148 = vmatprep.subr.mxu0 0.0
    %149 = vmatpush1.msra.mxu0 0.0
    %150 = vmatprep.subr.mxu0 0.0
    %151 = vmatpush1.msra.mxu0 0.0
    %152 = vmatprep.subr.mxu0 0.0
    %153 = vmatpush1.msra.mxu0 0.0
    %154 = vmatprep.subr.mxu0 0.0
    %155 = vmatpush1.msra.mxu0 0.0
    %156 = vmatprep.mubr.f32.mxu0 0.0
    %157 = vmatmul.mubr.f32.gmra.mrb[0].mxu0 %v81
    %v158 = vpop.f32.mrb[0].mxu0
    %v159 = vadd.f32 %v62, %v158
    %v160 = vpop.f32.mrb[0].mxu0
    %161 = vmatprep.mubr.f32.mxu0 0.0
    %162 = vmatmul.mubr.f32.gmra.mrb[0].mxu0 %v84
    %v163 = vpop.f32.mrb[0].mxu0
    %v164 = vadd.f32 %v67, %v163
    %v165 = vpop.f32.mrb[0].mxu0
    %166 = vmatprep.mubr.f32.mxu0 0.0
    %167 = vmatmul.mubr.f32.gmra.mrb[0].mxu0 %v87
    %v168 = vpop.f32.mrb[0].mxu0
    %v169 = vadd.f32 %v72, %v168
    %v170 = vpop.f32.mrb[0].mxu0
    %171 = vmatprep.mubr.f32.mxu0 0.0
    %172 = vmatmul.mubr.f32.gmra.mrb[0].mxu0 %v90
    %v173 = vpop.f32.mrb[0].mxu0
    %v174 = vadd.f32 %v77, %v173
    %v175 = vpop.f32.mrb[0].mxu0
    %176 = vdwg.mxu0
    %v177 = vld [vmem:[%s4] sm:$0xff]
    %v178 = vld [vmem:[%s4 + $0x8] sm:$0xff]
    %v179 = vld [vmem:[%s4 + $0x10] sm:$0xff]
    %v180 = vld [vmem:[%s4 + $0x18] sm:$0xff]
    %v181 = vld [vmem:[%s1] sm:$0xff]
    %v182 = vld [vmem:[%s1 + $0x8] sm:$0xff]
    %v183 = vld [vmem:[%s1 + $0x10] sm:$0xff]
    %v184 = vld [vmem:[%s5] sm:$0xff]
    %v185 = vld [vmem:[%s5 + $0x8] sm:$0xff]
    %v186 = vld [vmem:[%s5 + $0x10] sm:$0xff]
    %v187 = vld [vmem:[%s5 + $0x18] sm:$0xff]
    %189 = vset.pattern.permute.xlu0 0
    %190 = vperm.xlu0 %189, %v184
    %v191 = vpop.permute.xlu0 %190
    %194 = vset.pattern.permute.xlu0 0
    %195 = vperm.xlu0 %194, %v185
    %v196 = vpop.permute.xlu0 %195
    %199 = vset.pattern.permute.xlu0 0
    %200 = vperm.xlu0 %199, %v186
    %v201 = vpop.permute.xlu0 %200
    %204 = vset.pattern.permute.xlu0 0
    %205 = vperm.xlu0 %204, %v187
    %v206 = vpop.permute.xlu0 %205
    %vm208 = vcmask 195584
    %v210 = vsel %vm208, %v177, 0
    %v213 = vsel %vm208, %v178, 0
    %v216 = vsel %vm208, %v179, 0
    %v219 = vsel %vm208, %v180, 0
    %221 = vmatprep.subr.mxu0 0.0
    %222 = vmatpush1.msra.mxu0 %v181
    %223 = vmatprep.subr.mxu0 0.0
    %224 = vmatpush1.msra.mxu0 %v182
    %225 = vmatprep.subr.mxu0 0.0
    %226 = vmatpush1.msra.mxu0 %v183
    %227 = vmatprep.subr.mxu0 0.0
    %228 = vmatpush1.msra.mxu0 0.0
    %229 = vmatprep.subr.mxu0 0.0
    %230 = vmatpush1.msra.mxu0 0.0
    %231 = vmatprep.subr.mxu0 0.0
    %232 = vmatpush1.msra.mxu0 0.0
    %233 = vmatprep.subr.mxu0 0.0
    %234 = vmatpush1.msra.mxu0 0.0
    %235 = vmatprep.subr.mxu0 0.0
    %236 = vmatpush1.msra.mxu0 0.0
    %237 = vmatprep.subr.mxu0 0.0
    %238 = vmatpush1.msra.mxu0 0.0
    %239 = vmatprep.subr.mxu0 0.0
    %240 = vmatpush1.msra.mxu0 0.0
    %241 = vmatprep.subr.mxu0 0.0
    %242 = vmatpush1.msra.mxu0 0.0
    %243 = vmatprep.subr.mxu0 0.0
    %244 = vmatpush1.msra.mxu0 0.0
    %245 = vmatprep.subr.mxu0 0.0
    %246 = vmatpush1.msra.mxu0 0.0
    %247 = vmatprep.subr.mxu0 0.0
    %248 = vmatpush1.msra.mxu0 0.0
    %249 = vmatprep.subr.mxu0 0.0
    %250 = vmatpush1.msra.mxu0 0.0
    %251 = vmatprep.subr.mxu0 0.0
    %252 = vmatpush1.msra.mxu0 0.0
    %253 = vmatprep.subr.mxu0 0.0
    %254 = vmatpush1.msra.mxu0 0.0
    %255 = vmatprep.subr.mxu0 0.0
    %256 = vmatpush1.msra.mxu0 0.0
    %257 = vmatprep.subr.mxu0 0.0
    %258 = vmatpush1.msra.mxu0 0.0
    %259 = vmatprep.subr.mxu0 0.0
    %260 = vmatpush1.msra.mxu0 0.0
    %261 = vmatprep.subr.mxu0 0.0
    %262 = vmatpush1.msra.mxu0 0.0
    %263 = vmatprep.subr.mxu0 0.0
    %264 = vmatpush1.msra.mxu0 0.0
    %265 = vmatprep.subr.mxu0 0.0
    %266 = vmatpush1.msra.mxu0 0.0
    %267 = vmatprep.subr.mxu0 0.0
    %268 = vmatpush1.msra.mxu0 0.0
    %269 = vmatprep.subr.mxu0 0.0
    %270 = vmatpush1.msra.mxu0 0.0
    %271 = vmatprep.subr.mxu0 0.0
    %272 = vmatpush1.msra.mxu0 0.0
    %273 = vmatprep.subr.mxu0 0.0
    %274 = vmatpush1.msra.mxu0 0.0
    %275 = vmatprep.subr.mxu0 0.0
    %276 = vmatpush1.msra.mxu0 0.0
    %277 = vmatprep.subr.mxu0 0.0
    %278 = vmatpush1.msra.mxu0 0.0
    %279 = vmatprep.subr.mxu0 0.0
    %280 = vmatpush1.msra.mxu0 0.0
    %281 = vmatprep.subr.mxu0 0.0
    %282 = vmatpush1.msra.mxu0 0.0
    %283 = vmatprep.subr.mxu0 0.0
    %284 = vmatpush1.msra.mxu0 0.0
    %285 = vmatprep.mubr.f32.mxu0 0.0
    %286 = vmatmul.mubr.f32.gmra.mrb[0].mxu0 %v210
    %v287 = vpop.f32.mrb[0].mxu0
    %v288 = vadd.f32 %v191, %v287
    %v289 = vpop.f32.mrb[0].mxu0
    %290 = vmatprep.mubr.f32.mxu0 0.0
    %291 = vmatmul.mubr.f32.gmra.mrb[0].mxu0 %v213
    %v292 = vpop.f32.mrb[0].mxu0
    %v293 = vadd.f32 %v196, %v292
    %v294 = vpop.f32.mrb[0].mxu0
    %295 = vmatprep.mubr.f32.mxu0 0.0
    %296 = vmatmul.mubr.f32.gmra.mrb[0].mxu0 %v216
    %v297 = vpop.f32.mrb[0].mxu0
    %v298 = vadd.f32 %v201, %v297
    %v299 = vpop.f32.mrb[0].mxu0
    %300 = vmatprep.mubr.f32.mxu0 0.0
    %301 = vmatmul.mubr.f32.gmra.mrb[0].mxu0 %v219
    %v302 = vpop.f32.mrb[0].mxu0
    %v303 = vadd.f32 %v206, %v302
    %v304 = vpop.f32.mrb[0].mxu0
    %305 = vdwg.mxu0
    %v306 = vmul.f32 %v159, %v288
    %v307 = vmul.f32 %v164, %v293
    %v308 = vmul.f32 %v169, %v298
    %v309 = vmul.f32 %v174, %v303
    %v310 = vld [vmem:[%s6] sm:$0xff]
    %v311 = vld [vmem:[%s6 + $0x8] sm:$0xff]
    %v312 = vld [vmem:[%s6 + $0x10] sm:$0xff]
    %v313 = vld [vmem:[%s6 + $0x18] sm:$0xff]
    %v314 = vld [vmem:[%s7] sm:$0xff]
    %v315 = vld [vmem:[%s7 + $0x8] sm:$0xff]
    %v316 = vld [vmem:[%s7 + $0x10] sm:$0xff]
    %v317 = vld [vmem:[%s7 + $0x18] sm:$0xff]
    %vm318 = vcmask 261120
    %v320 = vsel %vm318, %v314, 0
    %v323 = vsel %vm318, %v315, 0
    %v326 = vsel %vm318, %v316, 0
    %v329 = vsel %vm318, %v317, 0
    %331 = vmatprep.subr.mxu0 0.0
    %332 = vmatpush1.msra.mxu0 %v159
    %333 = vmatprep.subr.mxu0 0.0
    %334 = vmatpush1.msra.mxu0 %v164
    %335 = vmatprep.subr.mxu0 0.0
    %336 = vmatpush1.msra.mxu0 %v169
    %337 = vmatprep.subr.mxu0 0.0
    %338 = vmatpush1.msra.mxu0 %v174
    %339 = vmatprep.subr.mxu0 0.0
    %340 = vmatpush1.msra.mxu0 0.0
    %341 = vmatprep.subr.mxu0 0.0
    %342 = vmatpush1.msra.mxu0 0.0
    %343 = vmatprep.subr.mxu0 0.0
    %344 = vmatpush1.msra.mxu0 0.0
    %345 = vmatprep.subr.mxu0 0.0
    %346 = vmatpush1.msra.mxu0 0.0
    %347 = vmatprep.subr.mxu0 0.0
    %348 = vmatpush1.msra.mxu0 0.0
    %349 = vmatprep.subr.mxu0 0.0
    %350 = vmatpush1.msra.mxu0 0.0
    %351 = vmatprep.subr.mxu0 0.0
    %352 = vmatpush1.msra.mxu0 0.0
    %353 = vmatprep.subr.mxu0 0.0
    %354 = vmatpush1.msra.mxu0 0.0
    %355 = vmatprep.subr.mxu0 0.0
    %356 = vmatpush1.msra.mxu0 0.0
    %357 = vmatprep.subr.mxu0 0.0
    %358 = vmatpush1.msra.mxu0 0.0
    %359 = vmatprep.subr.mxu0 0.0
    %360 = vmatpush1.msra.mxu0 0.0
    %361 = vmatprep.subr.mxu0 0.0
    %362 = vmatpush1.msra.mxu0 0.0
    %363 = vmatprep.subr.mxu0 0.0
    %364 = vmatpush1.msra.mxu0 0.0
    %365 = vmatprep.subr.mxu0 0.0
    %366 = vmatpush1.msra.mxu0 0.0
    %367 = vmatprep.subr.mxu0 0.0
    %368 = vmatpush1.msra.mxu0 0.0
    %369 = vmatprep.subr.mxu0 0.0
    %370 = vmatpush1.msra.mxu0 0.0
    %371 = vmatprep.subr.mxu0 0.0
    %372 = vmatpush1.msra.mxu0 0.0
    %373 = vmatprep.subr.mxu0 0.0
    %374 = vmatpush1.msra.mxu0 0.0
    %375 = vmatprep.subr.mxu0 0.0
    %376 = vmatpush1.msra.mxu0 0.0
    %377 = vmatprep.subr.mxu0 0.0
    %378 = vmatpush1.msra.mxu0 0.0
    %379 = vmatprep.subr.mxu0 0.0
    %380 = vmatpush1.msra.mxu0 0.0
    %381 = vmatprep.subr.mxu0 0.0
    %382 = vmatpush1.msra.mxu0 0.0
    %383 = vmatprep.subr.mxu0 0.0
    %384 = vmatpush1.msra.mxu0 0.0
    %385 = vmatprep.subr.mxu0 0.0
    %386 = vmatpush1.msra.mxu0 0.0
    %387 = vmatprep.subr.mxu0 0.0
    %388 = vmatpush1.msra.mxu0 0.0
    %389 = vmatprep.subr.mxu0 0.0
    %390 = vmatpush1.msra.mxu0 0.0
    %391 = vmatprep.subr.mxu0 0.0
    %392 = vmatpush1.msra.mxu0 0.0
    %393 = vmatprep.subr.mxu0 0.0
    %394 = vmatpush1.msra.mxu0 0.0
    %395 = vmatprep.mubr.f32.mxu0 0.0
    %396 = vmatmul.mubr.f32.gmra.mrb[0].mxu0 %v320
    %v397 = vpop.f32.mrb[0].mxu0
    %v398 = vadd.f32 0.0, %v397
    %v399 = vpop.f32.mrb[0].mxu0
    %400 = vmatprep.mubr.f32.mxu0 0.0
    %401 = vmatmul.mubr.f32.gmra.mrb[0].mxu0 %v323
    %v402 = vpop.f32.mrb[0].mxu0
    %v403 = vadd.f32 0.0, %v402
    %v404 = vpop.f32.mrb[0].mxu0
    %405 = vmatprep.mubr.f32.mxu0 0.0
    %406 = vmatmul.mubr.f32.gmra.mrb[0].mxu0 %v326
    %v407 = vpop.f32.mrb[0].mxu0
    %v408 = vadd.f32 0.0, %v407
    %v409 = vpop.f32.mrb[0].mxu0
    %410 = vmatprep.mubr.f32.mxu0 0.0
    %411 = vmatmul.mubr.f32.gmra.mrb[0].mxu0 %v329
    %v412 = vpop.f32.mrb[0].mxu0
    %v413 = vadd.f32 0.0, %v412
    %v414 = vpop.f32.mrb[0].mxu0
    %415 = vdwg.mxu0
    %v417 = vsel %vm318, %v310, 0
    %v420 = vsel %vm318, %v311, 0
    %v423 = vsel %vm318, %v312, 0
    %v426 = vsel %vm318, %v313, 0
    %428 = vmatprep.subr.mxu0 0.0
    %429 = vmatpush1.msra.mxu0 %v306
    %430 = vmatprep.subr.mxu0 0.0
    %431 = vmatpush1.msra.mxu0 %v307
    %432 = vmatprep.subr.mxu0 0.0
    %433 = vmatpush1.msra.mxu0 %v308
    %434 = vmatprep.subr.mxu0 0.0
    %435 = vmatpush1.msra.mxu0 %v309
    %436 = vmatprep.subr.mxu0 0.0
    %437 = vmatpush1.msra.mxu0 0.0
    %438 = vmatprep.subr.mxu0 0.0
    %439 = vmatpush1.msra.mxu0 0.0
    %440 = vmatprep.subr.mxu0 0.0
    %441 = vmatpush1.msra.mxu0 0.0
    %442 = vmatprep.subr.mxu0 0.0
    %443 = vmatpush1.msra.mxu0 0.0
    %444 = vmatprep.subr.mxu0 0.0
    %445 = vmatpush1.msra.mxu0 0.0
    %446 = vmatprep.subr.mxu0 0.0
    %447 = vmatpush1.msra.mxu0 0.0
    %448 = vmatprep.subr.mxu0 0.0
    %449 = vmatpush1.msra.mxu0 0.0
    %450 = vmatprep.subr.mxu0 0.0
    %451 = vmatpush1.msra.mxu0 0.0
    %452 = vmatprep.subr.mxu0 0.0
    %453 = vmatpush1.msra.mxu0 0.0
    %454 = vmatprep.subr.mxu0 0.0
    %455 = vmatpush1.msra.mxu0 0.0
    %456 = vmatprep.subr.mxu0 0.0
    %457 = vmatpush1.msra.mxu0 0.0
    %458 = vmatprep.subr.mxu0 0.0
    %459 = vmatpush1.msra.mxu0 0.0
    %460 = vmatprep.subr.mxu0 0.0
    %461 = vmatpush1.msra.mxu0 0.0
    %462 = vmatprep.subr.mxu0 0.0
    %463 = vmatpush1.msra.mxu0 0.0
    %464 = vmatprep.subr.mxu0 0.0
    %465 = vmatpush1.msra.mxu0 0.0
    %466 = vmatprep.subr.mxu0 0.0
    %467 = vmatpush1.msra.mxu0 0.0
    %468 = vmatprep.subr.mxu0 0.0
    %469 = vmatpush1.msra.mxu0 0.0
    %470 = vmatprep.subr.mxu0 0.0
    %471 = vmatpush1.msra.mxu0 0.0
    %472 = vmatprep.subr.mxu0 0.0
    %473 = vmatpush1.msra.mxu0 0.0
    %474 = vmatprep.subr.mxu0 0.0
    %475 = vmatpush1.msra.mxu0 0.0
    %476 = vmatprep.subr.mxu0 0.0
    %477 = vmatpush1.msra.mxu0 0.0
    %478 = vmatprep.subr.mxu0 0.0
    %479 = vmatpush1.msra.mxu0 0.0
    %480 = vmatprep.subr.mxu0 0.0
    %481 = vmatpush1.msra.mxu0 0.0
    %482 = vmatprep.subr.mxu0 0.0
    %483 = vmatpush1.msra.mxu0 0.0
    %484 = vmatprep.subr.mxu0 0.0
    %485 = vmatpush1.msra.mxu0 0.0
    %486 = vmatprep.subr.mxu0 0.0
    %487 = vmatpush1.msra.mxu0 0.0
    %488 = vmatprep.subr.mxu0 0.0
    %489 = vmatpush1.msra.mxu0 0.0
    %490 = vmatprep.subr.mxu0 0.0
    %491 = vmatpush1.msra.mxu0 0.0
    %492 = vmatprep.mubr.f32.mxu0 0.0
    %493 = vmatmul.mubr.f32.gmra.mrb[0].mxu0 %v417
    %v494 = vpop.f32.mrb[0].mxu0
    %v495 = vadd.f32 %v398, %v494
    %v496 = vpop.f32.mrb[0].mxu0
    %497 = vmatprep.mubr.f32.mxu0 0.0
    %498 = vmatmul.mubr.f32.gmra.mrb[0].mxu0 %v420
    %v499 = vpop.f32.mrb[0].mxu0
    %v500 = vadd.f32 %v403, %v499
    %v501 = vpop.f32.mrb[0].mxu0
    %502 = vmatprep.mubr.f32.mxu0 0.0
    %503 = vmatmul.mubr.f32.gmra.mrb[0].mxu0 %v423
    %v504 = vpop.f32.mrb[0].mxu0
    %v505 = vadd.f32 %v408, %v504
    %v506 = vpop.f32.mrb[0].mxu0
    %507 = vmatprep.mubr.f32.mxu0 0.0
    %508 = vmatmul.mubr.f32.gmra.mrb[0].mxu0 %v426
    %v509 = vpop.f32.mrb[0].mxu0
    %v510 = vadd.f32 %v413, %v509
    %v511 = vpop.f32.mrb[0].mxu0
    %512 = vdwg.mxu0
    %v513 = vld [vmem:[%s8] sm:$0xff]
    %v514 = vld [vmem:[%s8 + $0x8] sm:$0xff]
    %v515 = vld [vmem:[%s8 + $0x10] sm:$0xff]
    %v516 = vld [vmem:[%s8 + $0x18] sm:$0xff]
    %v518 = vsel %vm318, %v513, 0
    %v521 = vsel %vm318, %v514, 0
    %v524 = vsel %vm318, %v515, 0
    %v527 = vsel %vm318, %v516, 0
    %529 = vmatprep.subr.mxu0 0.0
    %530 = vmatpush1.msra.mxu0 %v288
    %531 = vmatprep.subr.mxu0 0.0
    %532 = vmatpush1.msra.mxu0 %v293
    %533 = vmatprep.subr.mxu0 0.0
    %534 = vmatpush1.msra.mxu0 %v298
    %535 = vmatprep.subr.mxu0 0.0
    %536 = vmatpush1.msra.mxu0 %v303
    %537 = vmatprep.subr.mxu0 0.0
    %538 = vmatpush1.msra.mxu0 0.0
    %539 = vmatprep.subr.mxu0 0.0
    %540 = vmatpush1.msra.mxu0 0.0
    %541 = vmatprep.subr.mxu0 0.0
    %542 = vmatpush1.msra.mxu0 0.0
    %543 = vmatprep.subr.mxu0 0.0
    %544 = vmatpush1.msra.mxu0 0.0
    %545 = vmatprep.subr.mxu0 0.0
    %546 = vmatpush1.msra.mxu0 0.0
    %547 = vmatprep.subr.mxu0 0.0
    %548 = vmatpush1.msra.mxu0 0.0
    %549 = vmatprep.subr.mxu0 0.0
    %550 = vmatpush1.msra.mxu0 0.0
    %551 = vmatprep.subr.mxu0 0.0
    %552 = vmatpush1.msra.mxu0 0.0
    %553 = vmatprep.subr.mxu0 0.0
    %554 = vmatpush1.msra.mxu0 0.0
    %555 = vmatprep.subr.mxu0 0.0
    %556 = vmatpush1.msra.mxu0 0.0
    %557 = vmatprep.subr.mxu0 0.0
    %558 = vmatpush1.msra.mxu0 0.0
    %559 = vmatprep.subr.mxu0 0.0
    %560 = vmatpush1.msra.mxu0 0.0
    %561 = vmatprep.subr.mxu0 0.0
    %562 = vmatpush1.msra.mxu0 0.0
    %563 = vmatprep.subr.mxu0 0.0
    %564 = vmatpush1.msra.mxu0 0.0
    %565 = vmatprep.subr.mxu0 0.0
    %566 = vmatpush1.msra.mxu0 0.0
    %567 = vmatprep.subr.mxu0 0.0
    %568 = vmatpush1.msra.mxu0 0.0
    %569 = vmatprep.subr.mxu0 0.0
    %570 = vmatpush1.msra.mxu0 0.0
    %571 = vmatprep.subr.mxu0 0.0
    %572 = vmatpush1.msra.mxu0 0.0
    %573 = vmatprep.subr.mxu0 0.0
    %574 = vmatpush1.msra.mxu0 0.0
    %575 = vmatprep.subr.mxu0 0.0
    %576 = vmatpush1.msra.mxu0 0.0
    %577 = vmatprep.subr.mxu0 0.0
    %578 = vmatpush1.msra.mxu0 0.0
    %579 = vmatprep.subr.mxu0 0.0
    %580 = vmatpush1.msra.mxu0 0.0
    %581 = vmatprep.subr.mxu0 0.0
    %582 = vmatpush1.msra.mxu0 0.0
    %583 = vmatprep.subr.mxu0 0.0
    %584 = vmatpush1.msra.mxu0 0.0
    %585 = vmatprep.subr.mxu0 0.0
    %586 = vmatpush1.msra.mxu0 0.0
    %587 = vmatprep.subr.mxu0 0.0
    %588 = vmatpush1.msra.mxu0 0.0
    %589 = vmatprep.subr.mxu0 0.0
    %590 = vmatpush1.msra.mxu0 0.0
    %591 = vmatprep.subr.mxu0 0.0
    %592 = vmatpush1.msra.mxu0 0.0
    %593 = vmatprep.mubr.f32.mxu0 0.0
    %594 = vmatmul.mubr.f32.gmra.mrb[0].mxu0 %v518
    %v595 = vpop.f32.mrb[0].mxu0
    %v596 = vadd.f32 0.0, %v595
    %v597 = vpop.f32.mrb[0].mxu0
    %598 = vmatprep.mubr.f32.mxu0 0.0
    %599 = vmatmul.mubr.f32.gmra.mrb[0].mxu0 %v521
    %v600 = vpop.f32.mrb[0].mxu0
    %v601 = vadd.f32 0.0, %v600
    %v602 = vpop.f32.mrb[0].mxu0
    %603 = vmatprep.mubr.f32.mxu0 0.0
    %604 = vmatmul.mubr.f32.gmra.mrb[0].mxu0 %v524
    %v605 = vpop.f32.mrb[0].mxu0
    %v606 = vadd.f32 0.0, %v605
    %v607 = vpop.f32.mrb[0].mxu0
    %608 = vmatprep.mubr.f32.mxu0 0.0
    %609 = vmatmul.mubr.f32.gmra.mrb[0].mxu0 %v527
    %v610 = vpop.f32.mrb[0].mxu0
    %v611 = vadd.f32 0.0, %v610
    %v612 = vpop.f32.mrb[0].mxu0
    %613 = vdwg.mxu0
    %v614 = vadd.f32 %v495, %v596
    %v615 = vadd.f32 %v500, %v601
    %v616 = vadd.f32 %v505, %v606
    %v617 = vadd.f32 %v510, %v611
    %v618 = vld [vmem:[%s9] sm:$0xff]
    %v619 = vld [vmem:[%s9 + $0x8] sm:$0xff]
    %v620 = vld [vmem:[%s9 + $0x10] sm:$0xff]
    %v621 = vld [vmem:[%s9 + $0x18] sm:$0xff]
    %623 = vset.pattern.permute.xlu0 0
    %624 = vperm.xlu0 %623, %v618
    %v625 = vpop.permute.xlu0 %624
    %628 = vset.pattern.permute.xlu0 0
    %629 = vperm.xlu0 %628, %v619
    %v630 = vpop.permute.xlu0 %629
    %633 = vset.pattern.permute.xlu0 0
    %634 = vperm.xlu0 %633, %v620
    %v635 = vpop.permute.xlu0 %634
    %638 = vset.pattern.permute.xlu0 0
    %639 = vperm.xlu0 %638, %v621
    %v640 = vpop.permute.xlu0 %639
    %v642 = vadd.f32 %v614, %v625
    %v643 = vadd.f32 %v615, %v630
    %v644 = vadd.f32 %v616, %v635
    %v645 = vadd.f32 %v617, %v640
    %v646 = vmax.f32 %v642, 0.0
    %v647 = vmax.f32 %v643, 0.0
    %v648 = vmax.f32 %v644, 0.0
    %v649 = vmax.f32 %v645, 0.0
    %v650 = vld [vmem:[%s10] sm:$0xff]
    %v651 = vld [vmem:[%s10 + $0x8] sm:$0xff]
    %v652 = vld [vmem:[%s11] sm:$0xff]
    %v653 = vld [vmem:[%s11 + $0x8] sm:$0xff]
    %655 = vset.pattern.permute.xlu0 0
    %656 = vperm.xlu0 %655, %v652
    %v657 = vpop.permute.xlu0 %656
    %660 = vset.pattern.permute.xlu0 0
    %661 = vperm.xlu0 %660, %v653
    %v662 = vpop.permute.xlu0 %661
    %v665 = vsel %vm318, %v650, 0
    %v668 = vsel %vm318, %v651, 0
    %670 = vmatprep.subr.mxu0 0.0
    %671 = vmatpush1.msra.mxu0 %v646
    %672 = vmatprep.subr.mxu0 0.0
    %673 = vmatpush1.msra.mxu0 %v647
    %674 = vmatprep.subr.mxu0 0.0
    %675 = vmatpush1.msra.mxu0 %v648
    %676 = vmatprep.subr.mxu0 0.0
    %677 = vmatpush1.msra.mxu0 %v649
    %678 = vmatprep.subr.mxu0 0.0
    %679 = vmatpush1.msra.mxu0 0.0
    %680 = vmatprep.subr.mxu0 0.0
    %681 = vmatpush1.msra.mxu0 0.0
    %682 = vmatprep.subr.mxu0 0.0
    %683 = vmatpush1.msra.mxu0 0.0
    %684 = vmatprep.subr.mxu0 0.0
    %685 = vmatpush1.msra.mxu0 0.0
    %686 = vmatprep.subr.mxu0 0.0
    %687 = vmatpush1.msra.mxu0 0.0
    %688 = vmatprep.subr.mxu0 0.0
    %689 = vmatpush1.msra.mxu0 0.0
    %690 = vmatprep.subr.mxu0 0.0
    %691 = vmatpush1.msra.mxu0 0.0
    %692 = vmatprep.subr.mxu0 0.0
    %693 = vmatpush1.msra.mxu0 0.0
    %694 = vmatprep.subr.mxu0 0.0
    %695 = vmatpush1.msra.mxu0 0.0
    %696 = vmatprep.subr.mxu0 0.0
    %697 = vmatpush1.msra.mxu0 0.0
    %698 = vmatprep.subr.mxu0 0.0
    %699 = vmatpush1.msra.mxu0 0.0
    %700 = vmatprep.subr.mxu0 0.0
    %701 = vmatpush1.msra.mxu0 0.0
    %702 = vmatprep.subr.mxu0 0.0
    %703 = vmatpush1.msra.mxu0 0.0
    %704 = vmatprep.subr.mxu0 0.0
    %705 = vmatpush1.msra.mxu0 0.0
    %706 = vmatprep.subr.mxu0 0.0
    %707 = vmatpush1.msra.mxu0 0.0
    %708 = vmatprep.subr.mxu0 0.0
    %709 = vmatpush1.msra.mxu0 0.0
    %710 = vmatprep.subr.mxu0 0.0
    %711 = vmatpush1.msra.mxu0 0.0
    %712 = vmatprep.subr.mxu0 0.0
    %713 = vmatpush1.msra.mxu0 0.0
    %714 = vmatprep.subr.mxu0 0.0
    %715 = vmatpush1.msra.mxu0 0.0
    %716 = vmatprep.subr.mxu0 0.0
    %717 = vmatpush1.msra.mxu0 0.0
    %718 = vmatprep.subr.mxu0 0.0
    %719 = vmatpush1.msra.mxu0 0.0
    %720 = vmatprep.subr.mxu0 0.0
    %721 = vmatpush1.msra.mxu0 0.0
    %722 = vmatprep.subr.mxu0 0.0
    %723 = vmatpush1.msra.mxu0 0.0
    %724 = vmatprep.subr.mxu0 0.0
    %725 = vmatpush1.msra.mxu0 0.0
    %726 = vmatprep.subr.mxu0 0.0
    %727 = vmatpush1.msra.mxu0 0.0
    %728 = vmatprep.subr.mxu0 0.0
    %729 = vmatpush1.msra.mxu0 0.0
    %730 = vmatprep.subr.mxu0 0.0
    %731 = vmatpush1.msra.mxu0 0.0
    %732 = vmatprep.subr.mxu0 0.0
    %733 = vmatpush1.msra.mxu0 0.0
    %734 = vmatprep.mubr.f32.mxu0 0.0
    %735 = vmatmul.mubr.f32.gmra.mrb[0].mxu0 %v665
    %v736 = vpop.f32.mrb[0].mxu0
    %v737 = vadd.f32 %v657, %v736
    %v738 = vpop.f32.mrb[0].mxu0
    %739 = vmatprep.mubr.f32.mxu0 0.0
    %740 = vmatmul.mubr.f32.gmra.mrb[0].mxu0 %v668
    %v741 = vpop.f32.mrb[0].mxu0
    %v742 = vadd.f32 %v662, %v741
    %v743 = vpop.f32.mrb[0].mxu0
    %744 = vdwg.mxu0
    %v745 = vmax.f32 %v737, 0.0
    %v746 = vmax.f32 %v742, 0.0
    %v747 = vld [vmem:[%s12] sm:$0x1]
    %s748 = sld [smem:[#allocation2]]
    %v749 = vstv %s748
    %v751 = vsel %vm79, %v747, 0
    %753 = vmatprep.subr.mxu0 0.0
    %754 = vmatpush1.msra.mxu0 %v745
    %755 = vmatprep.subr.mxu0 0.0
    %756 = vmatpush1.msra.mxu0 %v746
    %757 = vmatprep.subr.mxu0 0.0
    %758 = vmatpush1.msra.mxu0 0.0
    %759 = vmatprep.subr.mxu0 0.0
    %760 = vmatpush1.msra.mxu0 0.0
    %761 = vmatprep.subr.mxu0 0.0
    %762 = vmatpush1.msra.mxu0 0.0
    %763 = vmatprep.subr.mxu0 0.0
    %764 = vmatpush1.msra.mxu0 0.0
    %765 = vmatprep.subr.mxu0 0.0
    %766 = vmatpush1.msra.mxu0 0.0
    %767 = vmatprep.subr.mxu0 0.0
    %768 = vmatpush1.msra.mxu0 0.0
    %769 = vmatprep.subr.mxu0 0.0
    %770 = vmatpush1.msra.mxu0 0.0
    %771 = vmatprep.subr.mxu0 0.0
    %772 = vmatpush1.msra.mxu0 0.0
    %773 = vmatprep.subr.mxu0 0.0
    %774 = vmatpush1.msra.mxu0 0.0
    %775 = vmatprep.subr.mxu0 0.0
    %776 = vmatpush1.msra.mxu0 0.0
    %777 = vmatprep.subr.mxu0 0.0
    %778 = vmatpush1.msra.mxu0 0.0
    %779 = vmatprep.subr.mxu0 0.0
    %780 = vmatpush1.msra.mxu0 0.0
    %781 = vmatprep.subr.mxu0 0.0
    %782 = vmatpush1.msra.mxu0 0.0
    %783 = vmatprep.subr.mxu0 0.0
    %784 = vmatpush1.msra.mxu0 0.0
    %785 = vmatprep.subr.mxu0 0.0
    %786 = vmatpush1.msra.mxu0 0.0
    %787 = vmatprep.subr.mxu0 0.0
    %788 = vmatpush1.msra.mxu0 0.0
    %789 = vmatprep.subr.mxu0 0.0
    %790 = vmatpush1.msra.mxu0 0.0
    %791 = vmatprep.subr.mxu0 0.0
    %792 = vmatpush1.msra.mxu0 0.0
    %793 = vmatprep.subr.mxu0 0.0
    %794 = vmatpush1.msra.mxu0 0.0
    %795 = vmatprep.subr.mxu0 0.0
    %796 = vmatpush1.msra.mxu0 0.0
    %797 = vmatprep.subr.mxu0 0.0
    %798 = vmatpush1.msra.mxu0 0.0
    %799 = vmatprep.subr.mxu0 0.0
    %800 = vmatpush1.msra.mxu0 0.0
    %801 = vmatprep.subr.mxu0 0.0
    %802 = vmatpush1.msra.mxu0 0.0
    %803 = vmatprep.subr.mxu0 0.0
    %804 = vmatpush1.msra.mxu0 0.0
    %805 = vmatprep.subr.mxu0 0.0
    %806 = vmatpush1.msra.mxu0 0.0
    %807 = vmatprep.subr.mxu0 0.0
    %808 = vmatpush1.msra.mxu0 0.0
    %809 = vmatprep.subr.mxu0 0.0
    %810 = vmatpush1.msra.mxu0 0.0
    %811 = vmatprep.subr.mxu0 0.0
    %812 = vmatpush1.msra.mxu0 0.0
    %813 = vmatprep.subr.mxu0 0.0
    %814 = vmatpush1.msra.mxu0 0.0
    %815 = vmatprep.subr.mxu0 0.0
    %816 = vmatpush1.msra.mxu0 0.0
    %817 = vmatprep.mubr.f32.mxu0 0.0
    %818 = vmatmul.mubr.f32.gmra.mrb[0].mxu0 %v751
    %v819 = vpop.f32.mrb[0].mxu0
    %v820 = vadd.f32 %v749, %v819
    %v821 = vpop.f32.mrb[0].mxu0
    %822 = vdwg.mxu0
    %vm823 = vcmask 57344
    %824 = vst.msk [vmem:[#allocation3] sm:$0x1] %vm823, %v820
    // Predicated region
    $region58: #{tpu_custom_call.1} parent=1 // pred_check
      _
    $region59: #{tpu_custom_call.1} parent=1 // pred_check_branch
      %826 = sbr.rel (0) target = $region61
    $region60: #{tpu_custom_call.1} parent=1 // pred_region
      %s828 = ssub.s32 16, 16
      %829 = vsyncadd [#allocation4], %s828
      %s831 = sshll.u32 [#allocation3], 4
      %s832 = int_to_ptr.vmem [resolvable:$true] %s831
      %834 = dma.vmem_to_hbm [thread:$0]  %s832, 16, %s14, [#allocation4]
    $region61: #{tpu_custom_call.1} parent=1 // pred_fallthru
      _
    // Predicated region
    $region62: #{tpu_custom_call.1} parent=1 // pred_check
      _
    $region63: #{tpu_custom_call.1} parent=1 // pred_check_branch
      %836 = sbr.rel (0) target = $region65
    $region64: #{tpu_custom_call.1} parent=1 // pred_region
      %837 = dma.done [#allocation4], 16
    $region65: #{tpu_custom_call.1} parent=1 // pred_fallthru
      _
    %838 = vsyncpa [#allocation4], 1

</llo_original>
